<compile_context>
chip_gen: v5e
topology: v5e:2x2
jax: 0.10.0
libtpu: 0.0.40
codegen_flags: <defaults>
</compile_context>

<pallas_src>
import jax
import jax.numpy as jnp
from jax.experimental import pallas as pl
from jax.experimental.pallas import tpu as pltpu

# ----------------------------- model config (small) -------------------------
VOCAB_SIZE = 100
VOCAB_PAD = 128          # vocab padded to a lane-aligned size for the one-hot matmul
EMBED_DIM = 32
NUM_HEADS = 4
HEAD_DIM = EMBED_DIM // NUM_HEADS
NUM_LAYERS = 2
FFN_DIM = 4 * EMBED_DIM
OUT_DIM = 2
SEQ_LEN = 8
BATCH = 2
LN_EPS = 1e-5

# ----------------------------- misc-slab row layout --------------------------
ROW_TOK = 0                                   # (D, VOCAB_PAD) transposed token table
ROW_POS = ROW_TOK + EMBED_DIM                 # (S, 128) padded position table
ROW_EMB_LN_G = ROW_POS + SEQ_LEN
ROW_EMB_LN_B = ROW_EMB_LN_G + 1
ROW_LAYER_BASE = ROW_EMB_LN_B + 1
ROWS_PER_LAYER = 8
R_BQKV, R_BO, R_LN1G, R_LN1B, R_B1, R_B2, R_LN2G, R_LN2B = range(ROWS_PER_LAYER)
ROW_DEC_W = ROW_LAYER_BASE + NUM_LAYERS * ROWS_PER_LAYER    # (OUT_DIM, 128)
ROW_DEC_B = ROW_DEC_W + OUT_DIM
MISC_ROWS = 64                                # 61 used rows, padded to sublane multiple

_VMEM = pl.BlockSpec(memory_space=pltpu.MemorySpace.VMEM)


# ----------------------------- shared math -----------------------------------
def _layernorm(x, g, b):
    mu = jnp.mean(x, axis=-1, keepdims=True)
    var = jnp.mean((x - mu) ** 2, axis=-1, keepdims=True)
    return (x - mu) * jax.lax.rsqrt(var + LN_EPS) * g + b


# ----------------------------- fused kernel ----------------------------------
def roberta_fused_kernel(ids_ref, misc_ref, w_attn_ref, w_ffn_ref, o_ref):
    D, H, hd, S = EMBED_DIM, NUM_HEADS, HEAD_DIM, SEQ_LEN
    N = ids_ref.shape[0]                       # N = B * S
    B = N // S
    L = w_attn_ref.shape[0]
    Vp = misc_ref.shape[1]                     # 128 (padded vocab / lane width)

    misc = misc_ref[...]                       # (64, 128) — all vectors + tables

    # ---- embedding lookup (one-hot MXU matmul, trans-B against (D,Vp) table) ----
    ids = ids_ref[...]                                                  # (N, 1) int32
    onehot = (ids == jax.lax.broadcasted_iota(jnp.int32, (N, Vp), 1)
              ).astype(jnp.float32)                                     # (N, Vp)
    tok_t = misc[ROW_TOK:ROW_TOK + D, :]                                # (D, Vp)
    x = jax.lax.dot_general(onehot, tok_t, (((1,), (1,)), ((), ())),
                            preferred_element_type=jnp.float32)         # (N, D)
    pos = misc[ROW_POS:ROW_POS + S, :D]                                 # (S, D)
    x = x + jnp.broadcast_to(pos[None], (B, S, D)).reshape(N, D)
    x = _layernorm(x,
                   misc[ROW_EMB_LN_G:ROW_EMB_LN_G + 1, :D],
                   misc[ROW_EMB_LN_B:ROW_EMB_LN_B + 1, :D])             # (N, D) f32

    # ---- post-LN transformer encoder layers (statically unrolled) ----
    for l in range(L):
        base = ROW_LAYER_BASE + l * ROWS_PER_LAYER
        wa = w_attn_ref[l]                     # (D, 4D): [Wq*scale | Wk | Wv | Wo]
        wf = w_ffn_ref[l]                      # (2D, F): rows [0:D]=W1, [D:2D]=W2^T

        # fused QKV projection: ONE (N,D)x(D,3D) matmul (scale folded into Wq/bq)
        bqkv = misc[base + R_BQKV:base + R_BQKV + 1, :3 * D]            # (1, 3D)
        qkv = jnp.dot(x, wa[:, :3 * D],
                      preferred_element_type=jnp.float32) + bqkv        # (N, 3D)

        # per-(batch, head) attention on tiny (B,S,hd) slices
        ctx_heads = []
        for h in range(H):
            qh = qkv[:, h * hd:(h + 1) * hd].reshape(B, S, hd)
            kh = qkv[:, D + h * hd:D + (h + 1) * hd].reshape(B, S, hd)
            vh = qkv[:, 2 * D + h * hd:2 * D + (h + 1) * hd].reshape(B, S, hd)
            s_att = jnp.einsum("bqd,bkd->bqk", qh, kh,
                               preferred_element_type=jnp.float32)      # (B, S, S)
            s_att = s_att - jnp.max(s_att, axis=-1, keepdims=True)
            e = jnp.exp(s_att)
            p = e * pl.reciprocal(jnp.sum(e, axis=-1, keepdims=True), approx=True)
            ctx_heads.append(jnp.einsum("bqk,bkd->bqd", p, vh,
                                        preferred_element_type=jnp.float32
                                        ).reshape(N, hd))
        ctx = jnp.concatenate(ctx_heads, axis=-1)                       # (N, D)

        # output projection: ONE matmul whose K=D contraction sums over heads
        attn_out = jnp.dot(ctx, wa[:, 3 * D:4 * D],
                           preferred_element_type=jnp.float32) \
            + misc[base + R_BO:base + R_BO + 1, :D]                     # (N, D)
        h1 = _layernorm(x + attn_out,
                        misc[base + R_LN1G:base + R_LN1G + 1, :D],
                        misc[base + R_LN1B:base + R_LN1B + 1, :D])

        # feed-forward (W2 kept lane-dense, contracted in transposed-B form)
        f = jnp.dot(h1, wf[:D, :],
                    preferred_element_type=jnp.float32) \
            + misc[base + R_B1:base + R_B1 + 1, :]                      # (N, F)
        f = jax.nn.gelu(f, approximate=True)
        f = jax.lax.dot_general(f, wf[D:2 * D, :], (((1,), (1,)), ((), ())),
                                preferred_element_type=jnp.float32) \
            + misc[base + R_B2:base + R_B2 + 1, :D]                     # (N, D)
        x = _layernorm(h1 + f,
                       misc[base + R_LN2G:base + R_LN2G + 1, :D],
                       misc[base + R_LN2B:base + R_LN2B + 1, :D])

    # ---- CLS sentence representation + MlpDecoder (single Linear) ----
    rep = x.reshape(B, S, D)[:, 0, :]                                   # (B, D)
    dec_w_t = misc[ROW_DEC_W:ROW_DEC_W + OUT_DIM, :D]                   # (OUT, D)
    logits = jax.lax.dot_general(rep, dec_w_t, (((1,), (1,)), ((), ())),
                                 preferred_element_type=jnp.float32) \
        + misc[ROW_DEC_B:ROW_DEC_B + 1, :OUT_DIM]
    o_ref[...] = logits.astype(o_ref.dtype)


# ----------------------------- wrapper ----------------------------------------
def roberta_forward(packed, token_ids):
    B, S = token_ids.shape
    ids = token_ids.reshape(B * S, 1).astype(jnp.int32)   # free host-side reshape
    return pl.pallas_call(
        roberta_fused_kernel,
        out_shape=jax.ShapeDtypeStruct((B, OUT_DIM), jnp.float32),
        in_specs=[_VMEM] * 4,
        out_specs=_VMEM,
    )(ids, packed["misc"], packed["w_attn"], packed["w_ffn"])


# ----------------------------- natural parameters -----------------------------
def init_params(key):
    keys = iter(jax.random.split(key, 16))
    std = 0.02

    def nrm(shape):
        return (std * jax.random.normal(next(keys), shape)).astype(jnp.float32)

    L, D, F = NUM_LAYERS, EMBED_DIM, FFN_DIM
    return {
        "tok_emb": nrm((VOCAB_SIZE, D)),
        "pos_emb": nrm((SEQ_LEN, D)),
        "emb_ln_g": jnp.ones((D,), jnp.float32),
        "emb_ln_b": jnp.zeros((D,), jnp.float32),
        "wq": nrm((L, D, D)), "bq": jnp.zeros((L, D), jnp.float32),
        "wk": nrm((L, D, D)), "bk": jnp.zeros((L, D), jnp.float32),
        "wv": nrm((L, D, D)), "bv": jnp.zeros((L, D), jnp.float32),
        "wo": nrm((L, D, D)), "bo": jnp.zeros((L, D), jnp.float32),
        "ln1_g": jnp.ones((L, D), jnp.float32), "ln1_b": jnp.zeros((L, D), jnp.float32),
        "w1": nrm((L, D, F)), "b1": jnp.zeros((L, F), jnp.float32),
        "w2": nrm((L, F, D)), "b2": jnp.zeros((L, D), jnp.float32),
        "ln2_g": jnp.ones((L, D), jnp.float32), "ln2_b": jnp.zeros((L, D), jnp.float32),
        "dec_w": nrm((D, OUT_DIM)), "dec_b": jnp.zeros((OUT_DIM,), jnp.float32),
    }


# ----------------------------- host-side repacking -----------------------------
def pack_params(p):
    """Repack natural params into 3 lane-dense slabs (done once, host-side)."""
    L, D, F, S = NUM_LAYERS, EMBED_DIM, FFN_DIM, SEQ_LEN
    scale = 1.0 / float(HEAD_DIM) ** 0.5

    # attention slab: [Wq*scale | Wk | Wv | Wo] per layer -> (L, D, 4D) = (2, 32, 128)
    w_attn = jnp.stack(
        [jnp.concatenate([p["wq"][l] * scale, p["wk"][l], p["wv"][l], p["wo"][l]],
                         axis=1) for l in range(L)], axis=0)

    # FFN slab: rows [0:D]=W1, rows [D:2D]=W2^T -> (L, 2D, F) = (2, 64, 128)
    w_ffn = jnp.stack(
        [jnp.concatenate([p["w1"][l], p["w2"][l].T], axis=0) for l in range(L)], axis=0)

    # misc slab: every small tensor as lane-padded rows of a single (64, 128) array
    def row(vec):
        v = jnp.asarray(vec, jnp.float32).reshape(1, -1)
        return jnp.pad(v, ((0, 0), (0, 128 - v.shape[1])))

    tok_t = jnp.pad(p["tok_emb"], ((0, VOCAB_PAD - VOCAB_SIZE), (0, 0))).T   # (D, 128)
    rows = [tok_t,
            jnp.pad(p["pos_emb"], ((0, 0), (0, 128 - D))),                    # (S, 128)
            row(p["emb_ln_g"]), row(p["emb_ln_b"])]
    for l in range(L):
        bqkv = jnp.concatenate([p["bq"][l] * scale, p["bk"][l], p["bv"][l]])
        rows += [row(bqkv), row(p["bo"][l]),
                 row(p["ln1_g"][l]), row(p["ln1_b"][l]),
                 row(p["b1"][l]), row(p["b2"][l]),
                 row(p["ln2_g"][l]), row(p["ln2_b"][l])]
    rows += [jnp.pad(p["dec_w"].T, ((0, 0), (0, 128 - D))), row(p["dec_b"])]
    misc = jnp.concatenate(rows, axis=0)
    misc = jnp.pad(misc, ((0, MISC_ROWS - misc.shape[0]), (0, 0)))
    return {"w_attn": w_attn, "w_ffn": w_ffn, "misc": misc}


# ----------------------------- pure-JAX reference ------------------------------
def roberta_reference(p, token_ids):
    B, S = token_ids.shape
    D, H, hd = EMBED_DIM, NUM_HEADS, HEAD_DIM
    N = B * S
    x = p["tok_emb"][token_ids] + p["pos_emb"][None, :, :]
    x = _layernorm(x.reshape(N, D), p["emb_ln_g"], p["emb_ln_b"])
    for l in range(NUM_LAYERS):
        q = x @ p["wq"][l] + p["bq"][l]
        k = x @ p["wk"][l] + p["bk"][l]
        v = x @ p["wv"][l] + p["bv"][l]

        def split(t):
            return t.reshape(B, S, H, hd).transpose(0, 2, 1, 3)
        qh, kh, vh = split(q) * (1.0 / hd ** 0.5), split(k), split(v)
        att = jax.nn.softmax(jnp.einsum("bhqd,bhkd->bhqk", qh, kh), axis=-1)
        ctx = jnp.einsum("bhqk,bhkd->bhqd", att, vh
                         ).transpose(0, 2, 1, 3).reshape(N, H * hd)
        a = ctx @ p["wo"][l] + p["bo"][l]
        h1 = _layernorm(x + a, p["ln1_g"][l], p["ln1_b"][l])
        f = jax.nn.gelu(h1 @ p["w1"][l] + p["b1"][l], approximate=False)
        f = f @ p["w2"][l] + p["b2"][l]
        x = _layernorm(h1 + f, p["ln2_g"][l], p["ln2_b"][l])
    rep = x.reshape(B, S, D)[:, 0, :]
    return rep @ p["dec_w"] + p["dec_b"]


# ----------------------------- main --------------------------------------------
if __name__ == "__main__":
    key = jax.random.PRNGKey(0)
    pkey, dkey = jax.random.split(key)
    params = init_params(pkey)
    packed = pack_params(params)
    token_ids = jax.random.randint(dkey, (BATCH, SEQ_LEN), 0, VOCAB_SIZE, dtype=jnp.int32)

    logits = jax.jit(roberta_forward)(packed, token_ids)
    jax.block_until_ready(logits)
    assert logits.shape == (BATCH, OUT_DIM), logits.shape

    ref = roberta_reference(params, token_ids)
    assert jnp.allclose(logits, ref, atol=2e-3, rtol=2e-2), (logits, ref)
    print("KERNEL_OK")
</pallas_src>

<mosaic_0001>
module attributes {stable_mosaic.version = 11 : i64} {
  func.func @roberta_fused_kernel(%arg0: memref<16x1xi32, #tpu.memory_space<vmem>>, %arg1: memref<64x128xf32, #tpu.memory_space<vmem>>, %arg2: memref<2x32x128xf32, #tpu.memory_space<vmem>>, %arg3: memref<2x64x128xf32, #tpu.memory_space<vmem>>, %arg4: memref<2x2xf32, #tpu.memory_space<vmem>>) attributes {dimension_semantics = [], scalar_prefetch = 0 : i64, scratch_operands = 0 : i64, tpu.core_type = #tpu.core_type<tc>} {
    %c0 = arith.constant 0 : index
    %c0_0 = arith.constant 0 : index
    %0 = vector.load %arg1[%c0, %c0_0] : memref<64x128xf32, #tpu.memory_space<vmem>>, vector<64x128xf32>
    %c0_1 = arith.constant 0 : index
    %c0_2 = arith.constant 0 : index
    %1 = vector.load %arg0[%c0_1, %c0_2] : memref<16x1xi32, #tpu.memory_space<vmem>>, vector<16x1xi32>
    %2 = tpu.iota {dimensions = array<i32: 1>} : vector<16x128xi32>
    %3 = vector.broadcast %1 : vector<16x1xi32> to vector<16x128xi32>
    %4 = arith.cmpi eq, %3, %2 : vector<16x128xi32>
    %5 = arith.extui %4 : vector<16x128xi1> to vector<16x128xi32>
    %6 = arith.sitofp %5 : vector<16x128xi32> to vector<16x128xf32>
    %7 = vector.extract_strided_slice %0 {offsets = [0, 0], sizes = [32, 128], strides = [1, 1]} : vector<64x128xf32> to vector<32x128xf32>
    %cst = arith.constant dense<0.000000e+00> : vector<16x32xf32>
    %8 = tpu.matmul %6, %7, %cst {dimension_numbers = #tpu.dot_dimension_numbers<[1], [1], [0], [0], [0, 0, 1, 0], [], []>} : vector<16x128xf32>, vector<32x128xf32>, vector<16x32xf32> -> vector<16x32xf32>
    %9 = vector.extract_strided_slice %0 {offsets = [32, 0], sizes = [8, 32], strides = [1, 1]} : vector<64x128xf32> to vector<8x32xf32>
    %10 = vector.shape_cast %9 : vector<8x32xf32> to vector<1x8x32xf32>
    %11 = vector.shape_cast %10 : vector<1x8x32xf32> to vector<1x8x32xf32>
    %12 = vector.broadcast %11 : vector<1x8x32xf32> to vector<2x8x32xf32>
    %13 = vector.shape_cast %12 : vector<2x8x32xf32> to vector<16x32xf32>
    %14 = arith.addf %8, %13 : vector<16x32xf32>
    %15 = vector.extract_strided_slice %0 {offsets = [40, 0], sizes = [1, 32], strides = [1, 1]} : vector<64x128xf32> to vector<1x32xf32>
    %16 = vector.extract_strided_slice %0 {offsets = [41, 0], sizes = [1, 32], strides = [1, 1]} : vector<64x128xf32> to vector<1x32xf32>
    %cst_3 = arith.constant dense<0.000000e+00> : vector<16xf32>
    %17 = vector.multi_reduction <add>, %14, %cst_3 [1] : vector<16x32xf32> to vector<16xf32>
    %18 = vector.shape_cast %17 : vector<16xf32> to vector<16x1xf32>
    %cst_4 = arith.constant 3.200000e+01 : f32
    %19 = vector.broadcast %cst_4 : f32 to vector<16x1xf32>
    %20 = arith.divf %18, %19 : vector<16x1xf32>
    %21 = vector.broadcast %20 : vector<16x1xf32> to vector<16x32xf32>
    %22 = arith.subf %14, %21 : vector<16x32xf32>
    %23 = arith.mulf %22, %22 : vector<16x32xf32>
    %cst_5 = arith.constant dense<0.000000e+00> : vector<16xf32>
    %24 = vector.multi_reduction <add>, %23, %cst_5 [1] : vector<16x32xf32> to vector<16xf32>
    %25 = vector.shape_cast %24 : vector<16xf32> to vector<16x1xf32>
    %cst_6 = arith.constant 3.200000e+01 : f32
    %26 = vector.broadcast %cst_6 : f32 to vector<16x1xf32>
    %27 = arith.divf %25, %26 : vector<16x1xf32>
    %28 = vector.broadcast %20 : vector<16x1xf32> to vector<16x32xf32>
    %29 = arith.subf %14, %28 : vector<16x32xf32>
    %cst_7 = arith.constant 9.99999974E-6 : f32
    %30 = vector.broadcast %cst_7 : f32 to vector<16x1xf32>
    %31 = arith.addf %27, %30 : vector<16x1xf32>
    %32 = math.rsqrt %31 : vector<16x1xf32>
    %33 = vector.broadcast %32 : vector<16x1xf32> to vector<16x32xf32>
    %34 = arith.mulf %29, %33 : vector<16x32xf32>
    %35 = vector.broadcast %15 : vector<1x32xf32> to vector<16x32xf32>
    %36 = arith.mulf %34, %35 : vector<16x32xf32>
    %37 = vector.broadcast %16 : vector<1x32xf32> to vector<16x32xf32>
    %38 = arith.addf %36, %37 : vector<16x32xf32>
    %c0_8 = arith.constant 0 : index
    %c0_9 = arith.constant 0 : index
    %c0_10 = arith.constant 0 : index
    %39 = vector.load %arg2[%c0_8, %c0_9, %c0_10] : memref<2x32x128xf32, #tpu.memory_space<vmem>>, vector<1x32x128xf32>
    %40 = vector.shape_cast %39 : vector<1x32x128xf32> to vector<32x128xf32>
    %c0_11 = arith.constant 0 : index
    %c0_12 = arith.constant 0 : index
    %c0_13 = arith.constant 0 : index
    %41 = vector.load %arg3[%c0_11, %c0_12, %c0_13] : memref<2x64x128xf32, #tpu.memory_space<vmem>>, vector<1x64x128xf32>
    %42 = vector.shape_cast %41 : vector<1x64x128xf32> to vector<64x128xf32>
    %43 = vector.extract_strided_slice %0 {offsets = [42, 0], sizes = [1, 96], strides = [1, 1]} : vector<64x128xf32> to vector<1x96xf32>
    %44 = vector.extract_strided_slice %40 {offsets = [0, 0], sizes = [32, 96], strides = [1, 1]} : vector<32x128xf32> to vector<32x96xf32>
    %cst_14 = arith.constant dense<0.000000e+00> : vector<16x96xf32>
    %45 = tpu.matmul %38, %44, %cst_14 {dimension_numbers = #tpu.dot_dimension_numbers<[1], [0], [0], [1], [0, 0, 1, 1], [], []>} : vector<16x32xf32>, vector<32x96xf32>, vector<16x96xf32> -> vector<16x96xf32>
    %46 = vector.broadcast %43 : vector<1x96xf32> to vector<16x96xf32>
    %47 = arith.addf %45, %46 : vector<16x96xf32>
    %48 = vector.extract_strided_slice %47 {offsets = [0, 0], sizes = [16, 8], strides = [1, 1]} : vector<16x96xf32> to vector<16x8xf32>
    %49 = vector.shape_cast %48 : vector<16x8xf32> to vector<2x8x8xf32>
    %50 = vector.extract_strided_slice %47 {offsets = [0, 32], sizes = [16, 8], strides = [1, 1]} : vector<16x96xf32> to vector<16x8xf32>
    %51 = vector.shape_cast %50 : vector<16x8xf32> to vector<2x8x8xf32>
    %52 = vector.extract_strided_slice %47 {offsets = [0, 64], sizes = [16, 8], strides = [1, 1]} : vector<16x96xf32> to vector<16x8xf32>
    %53 = vector.shape_cast %52 : vector<16x8xf32> to vector<2x8x8xf32>
    "tpu.trace_start"() <{level = 10 : i32, message = "bqd,bkd->bqk"}> : () -> ()
    %cst_15 = arith.constant dense<0.000000e+00> : vector<2x8x8xf32>
    %54 = tpu.matmul %49, %51, %cst_15 {dimension_numbers = #tpu.dot_dimension_numbers<[2], [2], [1], [1], [0, 0, 0, 1, 1, 1], [0], [0]>} : vector<2x8x8xf32>, vector<2x8x8xf32>, vector<2x8x8xf32> -> vector<2x8x8xf32>
    "tpu.trace_stop"() : () -> ()
    %cst_16 = arith.constant dense<0xFF800000> : vector<2x8xf32>
    %55 = vector.multi_reduction <maximumf>, %54, %cst_16 [2] : vector<2x8x8xf32> to vector<2x8xf32>
    %56 = vector.shape_cast %55 : vector<2x8xf32> to vector<2x8x1xf32>
    %57 = vector.broadcast %56 : vector<2x8x1xf32> to vector<2x8x8xf32>
    %58 = arith.subf %54, %57 : vector<2x8x8xf32>
    %59 = math.exp %58 : vector<2x8x8xf32>
    %cst_17 = arith.constant dense<0.000000e+00> : vector<2x8xf32>
    %60 = vector.multi_reduction <add>, %59, %cst_17 [2] : vector<2x8x8xf32> to vector<2x8xf32>
    %61 = vector.shape_cast %60 : vector<2x8xf32> to vector<2x8x1xf32>
    %62 = tpu.reciprocal %61 {approx = true} : vector<2x8x1xf32> -> vector<2x8x1xf32>
    %63 = vector.broadcast %62 : vector<2x8x1xf32> to vector<2x8x8xf32>
    %64 = arith.mulf %59, %63 : vector<2x8x8xf32>
    "tpu.trace_start"() <{level = 10 : i32, message = "bqk,bkd->bqd"}> : () -> ()
    %cst_18 = arith.constant dense<0.000000e+00> : vector<2x8x8xf32>
    %65 = tpu.matmul %64, %53, %cst_18 {dimension_numbers = #tpu.dot_dimension_numbers<[2], [1], [1], [2], [0, 0, 0, 1, 1, 2], [0], [0]>} : vector<2x8x8xf32>, vector<2x8x8xf32>, vector<2x8x8xf32> -> vector<2x8x8xf32>
    "tpu.trace_stop"() : () -> ()
    %66 = vector.shape_cast %65 : vector<2x8x8xf32> to vector<16x8xf32>
    %67 = vector.extract_strided_slice %47 {offsets = [0, 8], sizes = [16, 8], strides = [1, 1]} : vector<16x96xf32> to vector<16x8xf32>
    %68 = vector.shape_cast %67 : vector<16x8xf32> to vector<2x8x8xf32>
    %69 = vector.extract_strided_slice %47 {offsets = [0, 40], sizes = [16, 8], strides = [1, 1]} : vector<16x96xf32> to vector<16x8xf32>
    %70 = vector.shape_cast %69 : vector<16x8xf32> to vector<2x8x8xf32>
    %71 = vector.extract_strided_slice %47 {offsets = [0, 72], sizes = [16, 8], strides = [1, 1]} : vector<16x96xf32> to vector<16x8xf32>
    %72 = vector.shape_cast %71 : vector<16x8xf32> to vector<2x8x8xf32>
    "tpu.trace_start"() <{level = 10 : i32, message = "bqd,bkd->bqk"}> : () -> ()
    %cst_19 = arith.constant dense<0.000000e+00> : vector<2x8x8xf32>
    %73 = tpu.matmul %68, %70, %cst_19 {dimension_numbers = #tpu.dot_dimension_numbers<[2], [2], [1], [1], [0, 0, 0, 1, 1, 1], [0], [0]>} : vector<2x8x8xf32>, vector<2x8x8xf32>, vector<2x8x8xf32> -> vector<2x8x8xf32>
    "tpu.trace_stop"() : () -> ()
    %cst_20 = arith.constant dense<0xFF800000> : vector<2x8xf32>
    %74 = vector.multi_reduction <maximumf>, %73, %cst_20 [2] : vector<2x8x8xf32> to vector<2x8xf32>
    %75 = vector.shape_cast %74 : vector<2x8xf32> to vector<2x8x1xf32>
    %76 = vector.broadcast %75 : vector<2x8x1xf32> to vector<2x8x8xf32>
    %77 = arith.subf %73, %76 : vector<2x8x8xf32>
    %78 = math.exp %77 : vector<2x8x8xf32>
    %cst_21 = arith.constant dense<0.000000e+00> : vector<2x8xf32>
    %79 = vector.multi_reduction <add>, %78, %cst_21 [2] : vector<2x8x8xf32> to vector<2x8xf32>
    %80 = vector.shape_cast %79 : vector<2x8xf32> to vector<2x8x1xf32>
    %81 = tpu.reciprocal %80 {approx = true} : vector<2x8x1xf32> -> vector<2x8x1xf32>
    %82 = vector.broadcast %81 : vector<2x8x1xf32> to vector<2x8x8xf32>
    %83 = arith.mulf %78, %82 : vector<2x8x8xf32>
    "tpu.trace_start"() <{level = 10 : i32, message = "bqk,bkd->bqd"}> : () -> ()
    %cst_22 = arith.constant dense<0.000000e+00> : vector<2x8x8xf32>
    %84 = tpu.matmul %83, %72, %cst_22 {dimension_numbers = #tpu.dot_dimension_numbers<[2], [1], [1], [2], [0, 0, 0, 1, 1, 2], [0], [0]>} : vector<2x8x8xf32>, vector<2x8x8xf32>, vector<2x8x8xf32> -> vector<2x8x8xf32>
    "tpu.trace_stop"() : () -> ()
    %85 = vector.shape_cast %84 : vector<2x8x8xf32> to vector<16x8xf32>
    %86 = vector.extract_strided_slice %47 {offsets = [0, 16], sizes = [16, 8], strides = [1, 1]} : vector<16x96xf32> to vector<16x8xf32>
    %87 = vector.shape_cast %86 : vector<16x8xf32> to vector<2x8x8xf32>
    %88 = vector.extract_strided_slice %47 {offsets = [0, 48], sizes = [16, 8], strides = [1, 1]} : vector<16x96xf32> to vector<16x8xf32>
    %89 = vector.shape_cast %88 : vector<16x8xf32> to vector<2x8x8xf32>
    %90 = vector.extract_strided_slice %47 {offsets = [0, 80], sizes = [16, 8], strides = [1, 1]} : vector<16x96xf32> to vector<16x8xf32>
    %91 = vector.shape_cast %90 : vector<16x8xf32> to vector<2x8x8xf32>
    "tpu.trace_start"() <{level = 10 : i32, message = "bqd,bkd->bqk"}> : () -> ()
    %cst_23 = arith.constant dense<0.000000e+00> : vector<2x8x8xf32>
    %92 = tpu.matmul %87, %89, %cst_23 {dimension_numbers = #tpu.dot_dimension_numbers<[2], [2], [1], [1], [0, 0, 0, 1, 1, 1], [0], [0]>} : vector<2x8x8xf32>, vector<2x8x8xf32>, vector<2x8x8xf32> -> vector<2x8x8xf32>
    "tpu.trace_stop"() : () -> ()
    %cst_24 = arith.constant dense<0xFF800000> : vector<2x8xf32>
    %93 = vector.multi_reduction <maximumf>, %92, %cst_24 [2] : vector<2x8x8xf32> to vector<2x8xf32>
    %94 = vector.shape_cast %93 : vector<2x8xf32> to vector<2x8x1xf32>
    %95 = vector.broadcast %94 : vector<2x8x1xf32> to vector<2x8x8xf32>
    %96 = arith.subf %92, %95 : vector<2x8x8xf32>
    %97 = math.exp %96 : vector<2x8x8xf32>
    %cst_25 = arith.constant dense<0.000000e+00> : vector<2x8xf32>
    %98 = vector.multi_reduction <add>, %97, %cst_25 [2] : vector<2x8x8xf32> to vector<2x8xf32>
    %99 = vector.shape_cast %98 : vector<2x8xf32> to vector<2x8x1xf32>
    %100 = tpu.reciprocal %99 {approx = true} : vector<2x8x1xf32> -> vector<2x8x1xf32>
    %101 = vector.broadcast %100 : vector<2x8x1xf32> to vector<2x8x8xf32>
    %102 = arith.mulf %97, %101 : vector<2x8x8xf32>
    "tpu.trace_start"() <{level = 10 : i32, message = "bqk,bkd->bqd"}> : () -> ()
    %cst_26 = arith.constant dense<0.000000e+00> : vector<2x8x8xf32>
    %103 = tpu.matmul %102, %91, %cst_26 {dimension_numbers = #tpu.dot_dimension_numbers<[2], [1], [1], [2], [0, 0, 0, 1, 1, 2], [0], [0]>} : vector<2x8x8xf32>, vector<2x8x8xf32>, vector<2x8x8xf32> -> vector<2x8x8xf32>
    "tpu.trace_stop"() : () -> ()
    %104 = vector.shape_cast %103 : vector<2x8x8xf32> to vector<16x8xf32>
    %105 = vector.extract_strided_slice %47 {offsets = [0, 24], sizes = [16, 8], strides = [1, 1]} : vector<16x96xf32> to vector<16x8xf32>
    %106 = vector.shape_cast %105 : vector<16x8xf32> to vector<2x8x8xf32>
    %107 = vector.extract_strided_slice %47 {offsets = [0, 56], sizes = [16, 8], strides = [1, 1]} : vector<16x96xf32> to vector<16x8xf32>
    %108 = vector.shape_cast %107 : vector<16x8xf32> to vector<2x8x8xf32>
    %109 = vector.extract_strided_slice %47 {offsets = [0, 88], sizes = [16, 8], strides = [1, 1]} : vector<16x96xf32> to vector<16x8xf32>
    %110 = vector.shape_cast %109 : vector<16x8xf32> to vector<2x8x8xf32>
    "tpu.trace_start"() <{level = 10 : i32, message = "bqd,bkd->bqk"}> : () -> ()
    %cst_27 = arith.constant dense<0.000000e+00> : vector<2x8x8xf32>
    %111 = tpu.matmul %106, %108, %cst_27 {dimension_numbers = #tpu.dot_dimension_numbers<[2], [2], [1], [1], [0, 0, 0, 1, 1, 1], [0], [0]>} : vector<2x8x8xf32>, vector<2x8x8xf32>, vector<2x8x8xf32> -> vector<2x8x8xf32>
    "tpu.trace_stop"() : () -> ()
    %cst_28 = arith.constant dense<0xFF800000> : vector<2x8xf32>
    %112 = vector.multi_reduction <maximumf>, %111, %cst_28 [2] : vector<2x8x8xf32> to vector<2x8xf32>
    %113 = vector.shape_cast %112 : vector<2x8xf32> to vector<2x8x1xf32>
    %114 = vector.broadcast %113 : vector<2x8x1xf32> to vector<2x8x8xf32>
    %115 = arith.subf %111, %114 : vector<2x8x8xf32>
    %116 = math.exp %115 : vector<2x8x8xf32>
    %cst_29 = arith.constant dense<0.000000e+00> : vector<2x8xf32>
    %117 = vector.multi_reduction <add>, %116, %cst_29 [2] : vector<2x8x8xf32> to vector<2x8xf32>
    %118 = vector.shape_cast %117 : vector<2x8xf32> to vector<2x8x1xf32>
    %119 = tpu.reciprocal %118 {approx = true} : vector<2x8x1xf32> -> vector<2x8x1xf32>
    %120 = vector.broadcast %119 : vector<2x8x1xf32> to vector<2x8x8xf32>
    %121 = arith.mulf %116, %120 : vector<2x8x8xf32>
    "tpu.trace_start"() <{level = 10 : i32, message = "bqk,bkd->bqd"}> : () -> ()
    %cst_30 = arith.constant dense<0.000000e+00> : vector<2x8x8xf32>
    %122 = tpu.matmul %121, %110, %cst_30 {dimension_numbers = #tpu.dot_dimension_numbers<[2], [1], [1], [2], [0, 0, 0, 1, 1, 2], [0], [0]>} : vector<2x8x8xf32>, vector<2x8x8xf32>, vector<2x8x8xf32> -> vector<2x8x8xf32>
    "tpu.trace_stop"() : () -> ()
    %123 = vector.shape_cast %122 : vector<2x8x8xf32> to vector<16x8xf32>
    %124 = tpu.concatenate %66, %85, %104, %123 in 1 : vector<16x8xf32>, vector<16x8xf32>, vector<16x8xf32>, vector<16x8xf32> -> vector<16x32xf32>
    %125 = vector.extract_strided_slice %40 {offsets = [0, 96], sizes = [32, 32], strides = [1, 1]} : vector<32x128xf32> to vector<32x32xf32>
    %cst_31 = arith.constant dense<0.000000e+00> : vector<16x32xf32>
    %126 = tpu.matmul %124, %125, %cst_31 {dimension_numbers = #tpu.dot_dimension_numbers<[1], [0], [0], [1], [0, 0, 1, 1], [], []>} : vector<16x32xf32>, vector<32x32xf32>, vector<16x32xf32> -> vector<16x32xf32>
    %127 = vector.extract_strided_slice %0 {offsets = [43, 0], sizes = [1, 32], strides = [1, 1]} : vector<64x128xf32> to vector<1x32xf32>
    %128 = vector.broadcast %127 : vector<1x32xf32> to vector<16x32xf32>
    %129 = arith.addf %126, %128 : vector<16x32xf32>
    %130 = arith.addf %38, %129 : vector<16x32xf32>
    %131 = vector.extract_strided_slice %0 {offsets = [44, 0], sizes = [1, 32], strides = [1, 1]} : vector<64x128xf32> to vector<1x32xf32>
    %132 = vector.extract_strided_slice %0 {offsets = [45, 0], sizes = [1, 32], strides = [1, 1]} : vector<64x128xf32> to vector<1x32xf32>
    %cst_32 = arith.constant dense<0.000000e+00> : vector<16xf32>
    %133 = vector.multi_reduction <add>, %130, %cst_32 [1] : vector<16x32xf32> to vector<16xf32>
    %134 = vector.shape_cast %133 : vector<16xf32> to vector<16x1xf32>
    %cst_33 = arith.constant 3.200000e+01 : f32
    %135 = vector.broadcast %cst_33 : f32 to vector<16x1xf32>
    %136 = arith.divf %134, %135 : vector<16x1xf32>
    %137 = vector.broadcast %136 : vector<16x1xf32> to vector<16x32xf32>
    %138 = arith.subf %130, %137 : vector<16x32xf32>
    %139 = arith.mulf %138, %138 : vector<16x32xf32>
    %cst_34 = arith.constant dense<0.000000e+00> : vector<16xf32>
    %140 = vector.multi_reduction <add>, %139, %cst_34 [1] : vector<16x32xf32> to vector<16xf32>
    %141 = vector.shape_cast %140 : vector<16xf32> to vector<16x1xf32>
    %cst_35 = arith.constant 3.200000e+01 : f32
    %142 = vector.broadcast %cst_35 : f32 to vector<16x1xf32>
    %143 = arith.divf %141, %142 : vector<16x1xf32>
    %144 = vector.broadcast %136 : vector<16x1xf32> to vector<16x32xf32>
    %145 = arith.subf %130, %144 : vector<16x32xf32>
    %cst_36 = arith.constant 9.99999974E-6 : f32
    %146 = vector.broadcast %cst_36 : f32 to vector<16x1xf32>
    %147 = arith.addf %143, %146 : vector<16x1xf32>
    %148 = math.rsqrt %147 : vector<16x1xf32>
    %149 = vector.broadcast %148 : vector<16x1xf32> to vector<16x32xf32>
    %150 = arith.mulf %145, %149 : vector<16x32xf32>
    %151 = vector.broadcast %131 : vector<1x32xf32> to vector<16x32xf32>
    %152 = arith.mulf %150, %151 : vector<16x32xf32>
    %153 = vector.broadcast %132 : vector<1x32xf32> to vector<16x32xf32>
    %154 = arith.addf %152, %153 : vector<16x32xf32>
    %155 = vector.extract_strided_slice %42 {offsets = [0, 0], sizes = [32, 128], strides = [1, 1]} : vector<64x128xf32> to vector<32x128xf32>
    %cst_37 = arith.constant dense<0.000000e+00> : vector<16x128xf32>
    %156 = tpu.matmul %154, %155, %cst_37 {dimension_numbers = #tpu.dot_dimension_numbers<[1], [0], [0], [1], [0, 0, 1, 1], [], []>} : vector<16x32xf32>, vector<32x128xf32>, vector<16x128xf32> -> vector<16x128xf32>
    %157 = vector.extract_strided_slice %0 {offsets = [46, 0], sizes = [1, 128], strides = [1, 1]} : vector<64x128xf32> to vector<1x128xf32>
    %158 = vector.broadcast %157 : vector<1x128xf32> to vector<16x128xf32>
    %159 = arith.addf %156, %158 : vector<16x128xf32>
    %160 = arith.mulf %159, %159 : vector<16x128xf32>
    %161 = arith.mulf %159, %160 : vector<16x128xf32>
    %cst_38 = arith.constant 4.471500e-02 : f32
    %162 = vector.broadcast %cst_38 : f32 to vector<16x128xf32>
    %163 = arith.mulf %162, %161 : vector<16x128xf32>
    %164 = arith.addf %159, %163 : vector<16x128xf32>
    %cst_39 = arith.constant 0.797884583 : f32
    %165 = vector.broadcast %cst_39 : f32 to vector<16x128xf32>
    %166 = arith.mulf %165, %164 : vector<16x128xf32>
    %167 = math.tanh %166 : vector<16x128xf32>
    %cst_40 = arith.constant 1.000000e+00 : f32
    %168 = vector.broadcast %cst_40 : f32 to vector<16x128xf32>
    %169 = arith.addf %168, %167 : vector<16x128xf32>
    %cst_41 = arith.constant 5.000000e-01 : f32
    %170 = vector.broadcast %cst_41 : f32 to vector<16x128xf32>
    %171 = arith.mulf %170, %169 : vector<16x128xf32>
    %172 = arith.mulf %159, %171 : vector<16x128xf32>
    %173 = vector.extract_strided_slice %42 {offsets = [32, 0], sizes = [32, 128], strides = [1, 1]} : vector<64x128xf32> to vector<32x128xf32>
    %cst_42 = arith.constant dense<0.000000e+00> : vector<16x32xf32>
    %174 = tpu.matmul %172, %173, %cst_42 {dimension_numbers = #tpu.dot_dimension_numbers<[1], [1], [0], [0], [0, 0, 1, 0], [], []>} : vector<16x128xf32>, vector<32x128xf32>, vector<16x32xf32> -> vector<16x32xf32>
    %175 = vector.extract_strided_slice %0 {offsets = [47, 0], sizes = [1, 32], strides = [1, 1]} : vector<64x128xf32> to vector<1x32xf32>
    %176 = vector.broadcast %175 : vector<1x32xf32> to vector<16x32xf32>
    %177 = arith.addf %174, %176 : vector<16x32xf32>
    %178 = arith.addf %154, %177 : vector<16x32xf32>
    %179 = vector.extract_strided_slice %0 {offsets = [48, 0], sizes = [1, 32], strides = [1, 1]} : vector<64x128xf32> to vector<1x32xf32>
    %180 = vector.extract_strided_slice %0 {offsets = [49, 0], sizes = [1, 32], strides = [1, 1]} : vector<64x128xf32> to vector<1x32xf32>
    %cst_43 = arith.constant dense<0.000000e+00> : vector<16xf32>
    %181 = vector.multi_reduction <add>, %178, %cst_43 [1] : vector<16x32xf32> to vector<16xf32>
    %182 = vector.shape_cast %181 : vector<16xf32> to vector<16x1xf32>
    %cst_44 = arith.constant 3.200000e+01 : f32
    %183 = vector.broadcast %cst_44 : f32 to vector<16x1xf32>
    %184 = arith.divf %182, %183 : vector<16x1xf32>
    %185 = vector.broadcast %184 : vector<16x1xf32> to vector<16x32xf32>
    %186 = arith.subf %178, %185 : vector<16x32xf32>
    %187 = arith.mulf %186, %186 : vector<16x32xf32>
    %cst_45 = arith.constant dense<0.000000e+00> : vector<16xf32>
    %188 = vector.multi_reduction <add>, %187, %cst_45 [1] : vector<16x32xf32> to vector<16xf32>
    %189 = vector.shape_cast %188 : vector<16xf32> to vector<16x1xf32>
    %cst_46 = arith.constant 3.200000e+01 : f32
    %190 = vector.broadcast %cst_46 : f32 to vector<16x1xf32>
    %191 = arith.divf %189, %190 : vector<16x1xf32>
    %192 = vector.broadcast %184 : vector<16x1xf32> to vector<16x32xf32>
    %193 = arith.subf %178, %192 : vector<16x32xf32>
    %cst_47 = arith.constant 9.99999974E-6 : f32
    %194 = vector.broadcast %cst_47 : f32 to vector<16x1xf32>
    %195 = arith.addf %191, %194 : vector<16x1xf32>
    %196 = math.rsqrt %195 : vector<16x1xf32>
    %197 = vector.broadcast %196 : vector<16x1xf32> to vector<16x32xf32>
    %198 = arith.mulf %193, %197 : vector<16x32xf32>
    %199 = vector.broadcast %179 : vector<1x32xf32> to vector<16x32xf32>
    %200 = arith.mulf %198, %199 : vector<16x32xf32>
    %201 = vector.broadcast %180 : vector<1x32xf32> to vector<16x32xf32>
    %202 = arith.addf %200, %201 : vector<16x32xf32>
    %c1 = arith.constant 1 : index
    %c0_48 = arith.constant 0 : index
    %c0_49 = arith.constant 0 : index
    %203 = vector.load %arg2[%c1, %c0_48, %c0_49] : memref<2x32x128xf32, #tpu.memory_space<vmem>>, vector<1x32x128xf32>
    %204 = vector.shape_cast %203 : vector<1x32x128xf32> to vector<32x128xf32>
    %c1_50 = arith.constant 1 : index
    %c0_51 = arith.constant 0 : index
    %c0_52 = arith.constant 0 : index
    %205 = vector.load %arg3[%c1_50, %c0_51, %c0_52] : memref<2x64x128xf32, #tpu.memory_space<vmem>>, vector<1x64x128xf32>
    %206 = vector.shape_cast %205 : vector<1x64x128xf32> to vector<64x128xf32>
    %207 = vector.extract_strided_slice %0 {offsets = [50, 0], sizes = [1, 96], strides = [1, 1]} : vector<64x128xf32> to vector<1x96xf32>
    %208 = vector.extract_strided_slice %204 {offsets = [0, 0], sizes = [32, 96], strides = [1, 1]} : vector<32x128xf32> to vector<32x96xf32>
    %cst_53 = arith.constant dense<0.000000e+00> : vector<16x96xf32>
    %209 = tpu.matmul %202, %208, %cst_53 {dimension_numbers = #tpu.dot_dimension_numbers<[1], [0], [0], [1], [0, 0, 1, 1], [], []>} : vector<16x32xf32>, vector<32x96xf32>, vector<16x96xf32> -> vector<16x96xf32>
    %210 = vector.broadcast %207 : vector<1x96xf32> to vector<16x96xf32>
    %211 = arith.addf %209, %210 : vector<16x96xf32>
    %212 = vector.extract_strided_slice %211 {offsets = [0, 0], sizes = [16, 8], strides = [1, 1]} : vector<16x96xf32> to vector<16x8xf32>
    %213 = vector.shape_cast %212 : vector<16x8xf32> to vector<2x8x8xf32>
    %214 = vector.extract_strided_slice %211 {offsets = [0, 32], sizes = [16, 8], strides = [1, 1]} : vector<16x96xf32> to vector<16x8xf32>
    %215 = vector.shape_cast %214 : vector<16x8xf32> to vector<2x8x8xf32>
    %216 = vector.extract_strided_slice %211 {offsets = [0, 64], sizes = [16, 8], strides = [1, 1]} : vector<16x96xf32> to vector<16x8xf32>
    %217 = vector.shape_cast %216 : vector<16x8xf32> to vector<2x8x8xf32>
    "tpu.trace_start"() <{level = 10 : i32, message = "bqd,bkd->bqk"}> : () -> ()
    %cst_54 = arith.constant dense<0.000000e+00> : vector<2x8x8xf32>
    %218 = tpu.matmul %213, %215, %cst_54 {dimension_numbers = #tpu.dot_dimension_numbers<[2], [2], [1], [1], [0, 0, 0, 1, 1, 1], [0], [0]>} : vector<2x8x8xf32>, vector<2x8x8xf32>, vector<2x8x8xf32> -> vector<2x8x8xf32>
    "tpu.trace_stop"() : () -> ()
    %cst_55 = arith.constant dense<0xFF800000> : vector<2x8xf32>
    %219 = vector.multi_reduction <maximumf>, %218, %cst_55 [2] : vector<2x8x8xf32> to vector<2x8xf32>
    %220 = vector.shape_cast %219 : vector<2x8xf32> to vector<2x8x1xf32>
    %221 = vector.broadcast %220 : vector<2x8x1xf32> to vector<2x8x8xf32>
    %222 = arith.subf %218, %221 : vector<2x8x8xf32>
    %223 = math.exp %222 : vector<2x8x8xf32>
    %cst_56 = arith.constant dense<0.000000e+00> : vector<2x8xf32>
    %224 = vector.multi_reduction <add>, %223, %cst_56 [2] : vector<2x8x8xf32> to vector<2x8xf32>
    %225 = vector.shape_cast %224 : vector<2x8xf32> to vector<2x8x1xf32>
    %226 = tpu.reciprocal %225 {approx = true} : vector<2x8x1xf32> -> vector<2x8x1xf32>
    %227 = vector.broadcast %226 : vector<2x8x1xf32> to vector<2x8x8xf32>
    %228 = arith.mulf %223, %227 : vector<2x8x8xf32>
    "tpu.trace_start"() <{level = 10 : i32, message = "bqk,bkd->bqd"}> : () -> ()
    %cst_57 = arith.constant dense<0.000000e+00> : vector<2x8x8xf32>
    %229 = tpu.matmul %228, %217, %cst_57 {dimension_numbers = #tpu.dot_dimension_numbers<[2], [1], [1], [2], [0, 0, 0, 1, 1, 2], [0], [0]>} : vector<2x8x8xf32>, vector<2x8x8xf32>, vector<2x8x8xf32> -> vector<2x8x8xf32>
    "tpu.trace_stop"() : () -> ()
    %230 = vector.shape_cast %229 : vector<2x8x8xf32> to vector<16x8xf32>
    %231 = vector.extract_strided_slice %211 {offsets = [0, 8], sizes = [16, 8], strides = [1, 1]} : vector<16x96xf32> to vector<16x8xf32>
    %232 = vector.shape_cast %231 : vector<16x8xf32> to vector<2x8x8xf32>
    %233 = vector.extract_strided_slice %211 {offsets = [0, 40], sizes = [16, 8], strides = [1, 1]} : vector<16x96xf32> to vector<16x8xf32>
    %234 = vector.shape_cast %233 : vector<16x8xf32> to vector<2x8x8xf32>
    %235 = vector.extract_strided_slice %211 {offsets = [0, 72], sizes = [16, 8], strides = [1, 1]} : vector<16x96xf32> to vector<16x8xf32>
    %236 = vector.shape_cast %235 : vector<16x8xf32> to vector<2x8x8xf32>
    "tpu.trace_start"() <{level = 10 : i32, message = "bqd,bkd->bqk"}> : () -> ()
    %cst_58 = arith.constant dense<0.000000e+00> : vector<2x8x8xf32>
    %237 = tpu.matmul %232, %234, %cst_58 {dimension_numbers = #tpu.dot_dimension_numbers<[2], [2], [1], [1], [0, 0, 0, 1, 1, 1], [0], [0]>} : vector<2x8x8xf32>, vector<2x8x8xf32>, vector<2x8x8xf32> -> vector<2x8x8xf32>
    "tpu.trace_stop"() : () -> ()
    %cst_59 = arith.constant dense<0xFF800000> : vector<2x8xf32>
    %238 = vector.multi_reduction <maximumf>, %237, %cst_59 [2] : vector<2x8x8xf32> to vector<2x8xf32>
    %239 = vector.shape_cast %238 : vector<2x8xf32> to vector<2x8x1xf32>
    %240 = vector.broadcast %239 : vector<2x8x1xf32> to vector<2x8x8xf32>
    %241 = arith.subf %237, %240 : vector<2x8x8xf32>
    %242 = math.exp %241 : vector<2x8x8xf32>
    %cst_60 = arith.constant dense<0.000000e+00> : vector<2x8xf32>
    %243 = vector.multi_reduction <add>, %242, %cst_60 [2] : vector<2x8x8xf32> to vector<2x8xf32>
    %244 = vector.shape_cast %243 : vector<2x8xf32> to vector<2x8x1xf32>
    %245 = tpu.reciprocal %244 {approx = true} : vector<2x8x1xf32> -> vector<2x8x1xf32>
    %246 = vector.broadcast %245 : vector<2x8x1xf32> to vector<2x8x8xf32>
    %247 = arith.mulf %242, %246 : vector<2x8x8xf32>
    "tpu.trace_start"() <{level = 10 : i32, message = "bqk,bkd->bqd"}> : () -> ()
    %cst_61 = arith.constant dense<0.000000e+00> : vector<2x8x8xf32>
    %248 = tpu.matmul %247, %236, %cst_61 {dimension_numbers = #tpu.dot_dimension_numbers<[2], [1], [1], [2], [0, 0, 0, 1, 1, 2], [0], [0]>} : vector<2x8x8xf32>, vector<2x8x8xf32>, vector<2x8x8xf32> -> vector<2x8x8xf32>
    "tpu.trace_stop"() : () -> ()
    %249 = vector.shape_cast %248 : vector<2x8x8xf32> to vector<16x8xf32>
    %250 = vector.extract_strided_slice %211 {offsets = [0, 16], sizes = [16, 8], strides = [1, 1]} : vector<16x96xf32> to vector<16x8xf32>
    %251 = vector.shape_cast %250 : vector<16x8xf32> to vector<2x8x8xf32>
    %252 = vector.extract_strided_slice %211 {offsets = [0, 48], sizes = [16, 8], strides = [1, 1]} : vector<16x96xf32> to vector<16x8xf32>
    %253 = vector.shape_cast %252 : vector<16x8xf32> to vector<2x8x8xf32>
    %254 = vector.extract_strided_slice %211 {offsets = [0, 80], sizes = [16, 8], strides = [1, 1]} : vector<16x96xf32> to vector<16x8xf32>
    %255 = vector.shape_cast %254 : vector<16x8xf32> to vector<2x8x8xf32>
    "tpu.trace_start"() <{level = 10 : i32, message = "bqd,bkd->bqk"}> : () -> ()
    %cst_62 = arith.constant dense<0.000000e+00> : vector<2x8x8xf32>
    %256 = tpu.matmul %251, %253, %cst_62 {dimension_numbers = #tpu.dot_dimension_numbers<[2], [2], [1], [1], [0, 0, 0, 1, 1, 1], [0], [0]>} : vector<2x8x8xf32>, vector<2x8x8xf32>, vector<2x8x8xf32> -> vector<2x8x8xf32>
    "tpu.trace_stop"() : () -> ()
    %cst_63 = arith.constant dense<0xFF800000> : vector<2x8xf32>
    %257 = vector.multi_reduction <maximumf>, %256, %cst_63 [2] : vector<2x8x8xf32> to vector<2x8xf32>
    %258 = vector.shape_cast %257 : vector<2x8xf32> to vector<2x8x1xf32>
    %259 = vector.broadcast %258 : vector<2x8x1xf32> to vector<2x8x8xf32>
    %260 = arith.subf %256, %259 : vector<2x8x8xf32>
    %261 = math.exp %260 : vector<2x8x8xf32>
    %cst_64 = arith.constant dense<0.000000e+00> : vector<2x8xf32>
    %262 = vector.multi_reduction <add>, %261, %cst_64 [2] : vector<2x8x8xf32> to vector<2x8xf32>
    %263 = vector.shape_cast %262 : vector<2x8xf32> to vector<2x8x1xf32>
    %264 = tpu.reciprocal %263 {approx = true} : vector<2x8x1xf32> -> vector<2x8x1xf32>
    %265 = vector.broadcast %264 : vector<2x8x1xf32> to vector<2x8x8xf32>
    %266 = arith.mulf %261, %265 : vector<2x8x8xf32>
    "tpu.trace_start"() <{level = 10 : i32, message = "bqk,bkd->bqd"}> : () -> ()
    %cst_65 = arith.constant dense<0.000000e+00> : vector<2x8x8xf32>
    %267 = tpu.matmul %266, %255, %cst_65 {dimension_numbers = #tpu.dot_dimension_numbers<[2], [1], [1], [2], [0, 0, 0, 1, 1, 2], [0], [0]>} : vector<2x8x8xf32>, vector<2x8x8xf32>, vector<2x8x8xf32> -> vector<2x8x8xf32>
    "tpu.trace_stop"() : () -> ()
    %268 = vector.shape_cast %267 : vector<2x8x8xf32> to vector<16x8xf32>
    %269 = vector.extract_strided_slice %211 {offsets = [0, 24], sizes = [16, 8], strides = [1, 1]} : vector<16x96xf32> to vector<16x8xf32>
    %270 = vector.shape_cast %269 : vector<16x8xf32> to vector<2x8x8xf32>
    %271 = vector.extract_strided_slice %211 {offsets = [0, 56], sizes = [16, 8], strides = [1, 1]} : vector<16x96xf32> to vector<16x8xf32>
    %272 = vector.shape_cast %271 : vector<16x8xf32> to vector<2x8x8xf32>
    %273 = vector.extract_strided_slice %211 {offsets = [0, 88], sizes = [16, 8], strides = [1, 1]} : vector<16x96xf32> to vector<16x8xf32>
    %274 = vector.shape_cast %273 : vector<16x8xf32> to vector<2x8x8xf32>
    "tpu.trace_start"() <{level = 10 : i32, message = "bqd,bkd->bqk"}> : () -> ()
    %cst_66 = arith.constant dense<0.000000e+00> : vector<2x8x8xf32>
    %275 = tpu.matmul %270, %272, %cst_66 {dimension_numbers = #tpu.dot_dimension_numbers<[2], [2], [1], [1], [0, 0, 0, 1, 1, 1], [0], [0]>} : vector<2x8x8xf32>, vector<2x8x8xf32>, vector<2x8x8xf32> -> vector<2x8x8xf32>
    "tpu.trace_stop"() : () -> ()
    %cst_67 = arith.constant dense<0xFF800000> : vector<2x8xf32>
    %276 = vector.multi_reduction <maximumf>, %275, %cst_67 [2] : vector<2x8x8xf32> to vector<2x8xf32>
    %277 = vector.shape_cast %276 : vector<2x8xf32> to vector<2x8x1xf32>
    %278 = vector.broadcast %277 : vector<2x8x1xf32> to vector<2x8x8xf32>
    %279 = arith.subf %275, %278 : vector<2x8x8xf32>
    %280 = math.exp %279 : vector<2x8x8xf32>
    %cst_68 = arith.constant dense<0.000000e+00> : vector<2x8xf32>
    %281 = vector.multi_reduction <add>, %280, %cst_68 [2] : vector<2x8x8xf32> to vector<2x8xf32>
    %282 = vector.shape_cast %281 : vector<2x8xf32> to vector<2x8x1xf32>
    %283 = tpu.reciprocal %282 {approx = true} : vector<2x8x1xf32> -> vector<2x8x1xf32>
    %284 = vector.broadcast %283 : vector<2x8x1xf32> to vector<2x8x8xf32>
    %285 = arith.mulf %280, %284 : vector<2x8x8xf32>
    "tpu.trace_start"() <{level = 10 : i32, message = "bqk,bkd->bqd"}> : () -> ()
    %cst_69 = arith.constant dense<0.000000e+00> : vector<2x8x8xf32>
    %286 = tpu.matmul %285, %274, %cst_69 {dimension_numbers = #tpu.dot_dimension_numbers<[2], [1], [1], [2], [0, 0, 0, 1, 1, 2], [0], [0]>} : vector<2x8x8xf32>, vector<2x8x8xf32>, vector<2x8x8xf32> -> vector<2x8x8xf32>
    "tpu.trace_stop"() : () -> ()
    %287 = vector.shape_cast %286 : vector<2x8x8xf32> to vector<16x8xf32>
    %288 = tpu.concatenate %230, %249, %268, %287 in 1 : vector<16x8xf32>, vector<16x8xf32>, vector<16x8xf32>, vector<16x8xf32> -> vector<16x32xf32>
    %289 = vector.extract_strided_slice %204 {offsets = [0, 96], sizes = [32, 32], strides = [1, 1]} : vector<32x128xf32> to vector<32x32xf32>
    %cst_70 = arith.constant dense<0.000000e+00> : vector<16x32xf32>
    %290 = tpu.matmul %288, %289, %cst_70 {dimension_numbers = #tpu.dot_dimension_numbers<[1], [0], [0], [1], [0, 0, 1, 1], [], []>} : vector<16x32xf32>, vector<32x32xf32>, vector<16x32xf32> -> vector<16x32xf32>
    %291 = vector.extract_strided_slice %0 {offsets = [51, 0], sizes = [1, 32], strides = [1, 1]} : vector<64x128xf32> to vector<1x32xf32>
    %292 = vector.broadcast %291 : vector<1x32xf32> to vector<16x32xf32>
    %293 = arith.addf %290, %292 : vector<16x32xf32>
    %294 = arith.addf %202, %293 : vector<16x32xf32>
    %295 = vector.extract_strided_slice %0 {offsets = [52, 0], sizes = [1, 32], strides = [1, 1]} : vector<64x128xf32> to vector<1x32xf32>
    %296 = vector.extract_strided_slice %0 {offsets = [53, 0], sizes = [1, 32], strides = [1, 1]} : vector<64x128xf32> to vector<1x32xf32>
    %cst_71 = arith.constant dense<0.000000e+00> : vector<16xf32>
    %297 = vector.multi_reduction <add>, %294, %cst_71 [1] : vector<16x32xf32> to vector<16xf32>
    %298 = vector.shape_cast %297 : vector<16xf32> to vector<16x1xf32>
    %cst_72 = arith.constant 3.200000e+01 : f32
    %299 = vector.broadcast %cst_72 : f32 to vector<16x1xf32>
    %300 = arith.divf %298, %299 : vector<16x1xf32>
    %301 = vector.broadcast %300 : vector<16x1xf32> to vector<16x32xf32>
    %302 = arith.subf %294, %301 : vector<16x32xf32>
    %303 = arith.mulf %302, %302 : vector<16x32xf32>
    %cst_73 = arith.constant dense<0.000000e+00> : vector<16xf32>
    %304 = vector.multi_reduction <add>, %303, %cst_73 [1] : vector<16x32xf32> to vector<16xf32>
    %305 = vector.shape_cast %304 : vector<16xf32> to vector<16x1xf32>
    %cst_74 = arith.constant 3.200000e+01 : f32
    %306 = vector.broadcast %cst_74 : f32 to vector<16x1xf32>
    %307 = arith.divf %305, %306 : vector<16x1xf32>
    %308 = vector.broadcast %300 : vector<16x1xf32> to vector<16x32xf32>
    %309 = arith.subf %294, %308 : vector<16x32xf32>
    %cst_75 = arith.constant 9.99999974E-6 : f32
    %310 = vector.broadcast %cst_75 : f32 to vector<16x1xf32>
    %311 = arith.addf %307, %310 : vector<16x1xf32>
    %312 = math.rsqrt %311 : vector<16x1xf32>
    %313 = vector.broadcast %312 : vector<16x1xf32> to vector<16x32xf32>
    %314 = arith.mulf %309, %313 : vector<16x32xf32>
    %315 = vector.broadcast %295 : vector<1x32xf32> to vector<16x32xf32>
    %316 = arith.mulf %314, %315 : vector<16x32xf32>
    %317 = vector.broadcast %296 : vector<1x32xf32> to vector<16x32xf32>
    %318 = arith.addf %316, %317 : vector<16x32xf32>
    %319 = vector.extract_strided_slice %206 {offsets = [0, 0], sizes = [32, 128], strides = [1, 1]} : vector<64x128xf32> to vector<32x128xf32>
    %cst_76 = arith.constant dense<0.000000e+00> : vector<16x128xf32>
    %320 = tpu.matmul %318, %319, %cst_76 {dimension_numbers = #tpu.dot_dimension_numbers<[1], [0], [0], [1], [0, 0, 1, 1], [], []>} : vector<16x32xf32>, vector<32x128xf32>, vector<16x128xf32> -> vector<16x128xf32>
    %321 = vector.extract_strided_slice %0 {offsets = [54, 0], sizes = [1, 128], strides = [1, 1]} : vector<64x128xf32> to vector<1x128xf32>
    %322 = vector.broadcast %321 : vector<1x128xf32> to vector<16x128xf32>
    %323 = arith.addf %320, %322 : vector<16x128xf32>
    %324 = arith.mulf %323, %323 : vector<16x128xf32>
    %325 = arith.mulf %323, %324 : vector<16x128xf32>
    %cst_77 = arith.constant 4.471500e-02 : f32
    %326 = vector.broadcast %cst_77 : f32 to vector<16x128xf32>
    %327 = arith.mulf %326, %325 : vector<16x128xf32>
    %328 = arith.addf %323, %327 : vector<16x128xf32>
    %cst_78 = arith.constant 0.797884583 : f32
    %329 = vector.broadcast %cst_78 : f32 to vector<16x128xf32>
    %330 = arith.mulf %329, %328 : vector<16x128xf32>
    %331 = math.tanh %330 : vector<16x128xf32>
    %cst_79 = arith.constant 1.000000e+00 : f32
    %332 = vector.broadcast %cst_79 : f32 to vector<16x128xf32>
    %333 = arith.addf %332, %331 : vector<16x128xf32>
    %cst_80 = arith.constant 5.000000e-01 : f32
    %334 = vector.broadcast %cst_80 : f32 to vector<16x128xf32>
    %335 = arith.mulf %334, %333 : vector<16x128xf32>
    %336 = arith.mulf %323, %335 : vector<16x128xf32>
    %337 = vector.extract_strided_slice %206 {offsets = [32, 0], sizes = [32, 128], strides = [1, 1]} : vector<64x128xf32> to vector<32x128xf32>
    %cst_81 = arith.constant dense<0.000000e+00> : vector<16x32xf32>
    %338 = tpu.matmul %336, %337, %cst_81 {dimension_numbers = #tpu.dot_dimension_numbers<[1], [1], [0], [0], [0, 0, 1, 0], [], []>} : vector<16x128xf32>, vector<32x128xf32>, vector<16x32xf32> -> vector<16x32xf32>
    %339 = vector.extract_strided_slice %0 {offsets = [55, 0], sizes = [1, 32], strides = [1, 1]} : vector<64x128xf32> to vector<1x32xf32>
    %340 = vector.broadcast %339 : vector<1x32xf32> to vector<16x32xf32>
    %341 = arith.addf %338, %340 : vector<16x32xf32>
    %342 = arith.addf %318, %341 : vector<16x32xf32>
    %343 = vector.extract_strided_slice %0 {offsets = [56, 0], sizes = [1, 32], strides = [1, 1]} : vector<64x128xf32> to vector<1x32xf32>
    %344 = vector.extract_strided_slice %0 {offsets = [57, 0], sizes = [1, 32], strides = [1, 1]} : vector<64x128xf32> to vector<1x32xf32>
    %cst_82 = arith.constant dense<0.000000e+00> : vector<16xf32>
    %345 = vector.multi_reduction <add>, %342, %cst_82 [1] : vector<16x32xf32> to vector<16xf32>
    %346 = vector.shape_cast %345 : vector<16xf32> to vector<16x1xf32>
    %cst_83 = arith.constant 3.200000e+01 : f32
    %347 = vector.broadcast %cst_83 : f32 to vector<16x1xf32>
    %348 = arith.divf %346, %347 : vector<16x1xf32>
    %349 = vector.broadcast %348 : vector<16x1xf32> to vector<16x32xf32>
    %350 = arith.subf %342, %349 : vector<16x32xf32>
    %351 = arith.mulf %350, %350 : vector<16x32xf32>
    %cst_84 = arith.constant dense<0.000000e+00> : vector<16xf32>
    %352 = vector.multi_reduction <add>, %351, %cst_84 [1] : vector<16x32xf32> to vector<16xf32>
    %353 = vector.shape_cast %352 : vector<16xf32> to vector<16x1xf32>
    %cst_85 = arith.constant 3.200000e+01 : f32
    %354 = vector.broadcast %cst_85 : f32 to vector<16x1xf32>
    %355 = arith.divf %353, %354 : vector<16x1xf32>
    %356 = vector.broadcast %348 : vector<16x1xf32> to vector<16x32xf32>
    %357 = arith.subf %342, %356 : vector<16x32xf32>
    %cst_86 = arith.constant 9.99999974E-6 : f32
    %358 = vector.broadcast %cst_86 : f32 to vector<16x1xf32>
    %359 = arith.addf %355, %358 : vector<16x1xf32>
    %360 = math.rsqrt %359 : vector<16x1xf32>
    %361 = vector.broadcast %360 : vector<16x1xf32> to vector<16x32xf32>
    %362 = arith.mulf %357, %361 : vector<16x32xf32>
    %363 = vector.broadcast %343 : vector<1x32xf32> to vector<16x32xf32>
    %364 = arith.mulf %362, %363 : vector<16x32xf32>
    %365 = vector.broadcast %344 : vector<1x32xf32> to vector<16x32xf32>
    %366 = arith.addf %364, %365 : vector<16x32xf32>
    %367 = vector.shape_cast %366 : vector<16x32xf32> to vector<2x8x32xf32>
    %368 = vector.extract_strided_slice %367 {offsets = [0, 0, 0], sizes = [2, 1, 32], strides = [1, 1, 1]} : vector<2x8x32xf32> to vector<2x1x32xf32>
    %369 = vector.shape_cast %368 : vector<2x1x32xf32> to vector<2x32xf32>
    %370 = vector.extract_strided_slice %0 {offsets = [58, 0], sizes = [2, 32], strides = [1, 1]} : vector<64x128xf32> to vector<2x32xf32>
    %cst_87 = arith.constant dense<0.000000e+00> : vector<2x2xf32>
    %371 = tpu.matmul %369, %370, %cst_87 {dimension_numbers = #tpu.dot_dimension_numbers<[1], [1], [0], [0], [0, 0, 1, 0], [], []>} : vector<2x32xf32>, vector<2x32xf32>, vector<2x2xf32> -> vector<2x2xf32>
    %372 = vector.extract_strided_slice %0 {offsets = [60, 0], sizes = [1, 2], strides = [1, 1]} : vector<64x128xf32> to vector<1x2xf32>
    %373 = vector.broadcast %372 : vector<1x2xf32> to vector<2x2xf32>
    %374 = arith.addf %371, %373 : vector<2x2xf32>
    %c0_88 = arith.constant 0 : index
    %c0_89 = arith.constant 0 : index
    %375 = vector.load %arg4[%c0_88, %c0_89] : memref<2x2xf32, #tpu.memory_space<vmem>>, vector<2x2xf32>
    tpu.vector_store %arg4[%c0_88, %c0_89], %374 {strides = array<i32>} : memref<2x2xf32, #tpu.memory_space<vmem>>, vector<2x2xf32>,
    return
  }
}

</mosaic_0001>

<llo_original>
// kernel: roberta_forward.1
$region0: #{roberta_forward.1}
  #allocation0 [shape = 'u32[]', space=smem, size = 0x4, offset = 0x4, fixed_abs, tag = 'smem constant byte address 0x4 - core index']
  #allocation1 [shape = 'u32[72,128]{1,0:T(1,128)}', space=vmem, size = 0x9000, scoped, tag = 'internal scratch']
  %s0 = inlined_call_operand.vmem [shape: s32[16,1], index: 0, kind: input, shape index: {}]
  %s1 = inlined_call_operand.hbm [shape: f32[64,128], index: 1, kind: input, shape index: {}]
  %s2 = inlined_call_operand.hbm [shape: f32[2,32,128], index: 2, kind: input, shape index: {}]
  %s3 = inlined_call_operand.hbm [shape: f32[2,64,128], index: 3, kind: input, shape index: {}]
  %s4 = inlined_call_operand.hbm [shape: f32[2,2], index: 4, kind: output, shape index: {}]
  %s5 = sld [smem:[#allocation0]]
  $region38: #{roberta_forward.1} parent=0
    _
  %s7 = ssub.s32 1, %s5
  %s8 = scalar_select 0, %s7, %s5
  $region1: #{roberta_forward.1} parent=0
    #allocation2 [shape = 'u8[32768]{0}', space=vmem, size = 0x8000, scoped, tag = 'input window, operand 1, single buffered']
    #allocation3 [shape = 's32[1]{0}', space=sflag, size = 0x4, scoped, tag = 'scoped memory for roberta_forward.1']
    #allocation4 [shape = 's32[1]{0}', space=sflag, size = 0x4, scoped, tag = 'scoped memory for roberta_forward.1']
    #allocation5 [shape = 'u8[32768]{0}', space=vmem, size = 0x8000, scoped, tag = 'input window, operand 2, single buffered']
    #allocation6 [shape = 's32[1]{0}', space=sflag, size = 0x4, scoped, tag = 'scoped memory for roberta_forward.1']
    #allocation7 [shape = 'u8[65536]{0}', space=vmem, size = 0x10000, scoped, tag = 'input window, operand 3, single buffered']
    #allocation8 [shape = 'u8[1024]{0}', space=vmem, size = 0x400, scoped, tag = 'output window, operand 0, single buffered']
    %9 = vsyncpa [#allocation3], 0
    %10 = vsyncpa [#allocation6], 0
    %11 = vsyncpa [#allocation4], 0
    // Predicated region
    $region2: #{roberta_forward.1} parent=1 // pred_check
      _
    $region3: #{roberta_forward.1} parent=1 // pred_check_branch
      %13 = sbr.rel (0) target = $region5
    $region4: #{roberta_forward.1} parent=1 // pred_region
      _
    $region5: #{roberta_forward.1} parent=1 // pred_fallthru
      _
    // Predicated region
    $region6: #{roberta_forward.1} parent=1 // pred_check
      _
    $region7: #{roberta_forward.1} parent=1 // pred_check_branch
      %15 = sbr.rel (0) target = $region9
    $region8: #{roberta_forward.1} parent=1 // pred_region
      %17 = vsyncadd [#allocation3], 0
      %s18 = sshll.u32 %s1, 4
      %s19 = int_to_ptr.hbm [resolvable:$true] %s18
      %s20 = sshll.u32 [#allocation2], 4
      %s21 = int_to_ptr.vmem [resolvable:$true] %s20
      %26 = dma.hbm_to_vmem [thread:$0]  %s19, 1024, %s21, [#allocation3], 128, 128, 8
    $region9: #{roberta_forward.1} parent=1 // pred_fallthru
      _
    // Predicated region
    $region10: #{roberta_forward.1} parent=1 // pred_check
      _
    $region11: #{roberta_forward.1} parent=1 // pred_check_branch
      %28 = sbr.rel (0) target = $region13
    $region12: #{roberta_forward.1} parent=1 // pred_region
      %30 = vsyncadd [#allocation6], 0
      %s31 = sshll.u32 %s2, 4
      %s32 = int_to_ptr.hbm [resolvable:$true] %s31
      %s33 = sshll.u32 [#allocation5], 4
      %s34 = int_to_ptr.vmem [resolvable:$true] %s33
      %39 = dma.hbm_to_vmem [thread:$0]  %s32, 1024, %s34, [#allocation6], 128, 128, 8
    $region13: #{roberta_forward.1} parent=1 // pred_fallthru
      _
    // Predicated region
    $region14: #{roberta_forward.1} parent=1 // pred_check
      _
    $region15: #{roberta_forward.1} parent=1 // pred_check_branch
      %41 = sbr.rel (0) target = $region17
    $region16: #{roberta_forward.1} parent=1 // pred_region
      %43 = vsyncadd [#allocation6], 0
      %s44 = sshll.u32 %s3, 4
      %s45 = int_to_ptr.hbm [resolvable:$true] %s44
      %s46 = sshll.u32 [#allocation7], 4
      %s47 = int_to_ptr.vmem [resolvable:$true] %s46
      %52 = dma.hbm_to_vmem [thread:$0]  %s45, 2048, %s47, [#allocation6], 128, 128, 8
    $region17: #{roberta_forward.1} parent=1 // pred_fallthru
      _
    // Predicated region
    $region18: #{roberta_forward.1} parent=1 // pred_check
      _
    $region19: #{roberta_forward.1} parent=1 // pred_check_branch
      %54 = sbr.rel (0) target = $region21
    $region20: #{roberta_forward.1} parent=1 // pred_region
      %56 = dma.done [#allocation3], 1024
    $region21: #{roberta_forward.1} parent=1 // pred_fallthru
      _
    // Predicated region
    $region22: #{roberta_forward.1} parent=1 // pred_check
      _
    $region23: #{roberta_forward.1} parent=1 // pred_check_branch
      %58 = sbr.rel (0) target = $region25
    $region24: #{roberta_forward.1} parent=1 // pred_region
      %60 = dma.done [#allocation6], 1024
    $region25: #{roberta_forward.1} parent=1 // pred_fallthru
      _
    // Predicated region
    $region26: #{roberta_forward.1} parent=1 // pred_check
      _
    $region27: #{roberta_forward.1} parent=1 // pred_check_branch
      %62 = sbr.rel (0) target = $region29
    $region28: #{roberta_forward.1} parent=1 // pred_region
      %64 = dma.done [#allocation6], 2048
    $region29: #{roberta_forward.1} parent=1 // pred_fallthru
      _
    %v65 = vld [vmem:[#allocation2] sm:$0xff]
    %v66 = vld [vmem:[#allocation2 + $0x8] sm:$0xff]
    %v67 = vld [vmem:[#allocation2 + $0x10] sm:$0xff]
    %v68 = vld [vmem:[#allocation2 + $0x18] sm:$0xff]
    %v69 = vld [vmem:[#allocation2 + $0x20] sm:$0xff]
    %v70 = vld [vmem:[#allocation2 + $0x28] sm:$0xff]
    %v71 = vld [vmem:[#allocation2 + $0x30] sm:$0xff]
    %v72 = vld [vmem:[#allocation2 + $0x38] sm:$0xff]
    %v73 = vld [vmem:[%s0] sm:$0xff]
    %v74 = vld [vmem:[%s0 + $0x8] sm:$0xff]
    %v75 = vlaneseq
    %v76 = vand.u32 %v75, 127
    %77 = vset.pattern.permute.xlu0 0
    %78 = vperm.xlu0 %77, %v73
    %v79 = vpop.permute.xlu0 %78
    %80 = vset.pattern.permute.xlu0 0
    %81 = vperm.xlu0 %80, %v74
    %v82 = vpop.permute.xlu0 %81
    %vm83 = vcmp.eq.s32.totalorder %v79, %v76
    %vm84 = vcmp.eq.s32.totalorder %v82, %v76
    %v85 = vsel %vm83, 1, 0
    %v86 = vsel %vm84, 1, 0
    %v87 = vcvt.s32.f32 %v85
    %v88 = vcvt.s32.f32 %v86
    %89 = vmatpush.xpose.msra.mxu0 0.0
    %90 = vmatpush.xpose.msra.mxu0 0.0
    %91 = vmatpush.xpose.msra.mxu0 0.0
    %92 = vmatpush.xpose.msra.mxu0 0.0
    %93 = vmatpush.xpose.msra.mxu0 0.0
    %94 = vmatpush.xpose.msra.mxu0 0.0
    %95 = vmatpush.xpose.msra.mxu0 0.0
    %96 = vmatpush.xpose.msra.mxu0 0.0
    %97 = vmatpush.xpose.msra.mxu0 0.0
    %98 = vmatpush.xpose.msra.mxu0 0.0
    %99 = vmatpush.xpose.msra.mxu0 0.0
    %100 = vmatpush.xpose.msra.mxu0 0.0
    %101 = vmatpush.xpose.msra.mxu0 %v68
    %102 = vmatpush.xpose.msra.mxu0 %v67
    %103 = vmatpush.xpose.msra.mxu0 %v66
    %104 = vmatpush.xpose.msra.mxu0 %v65
    %105 = vmatmul.f32.gmra.mxu0 %v87
    %v106 = vpop.f32.mrf.mxu0
    %v107 = vadd.f32 %v69, %v106
    %108 = vmatmul.f32.gmra.mxu0 %v88
    %v109 = vpop.f32.mrf.mxu0
    %v110 = vadd.f32 %v69, %v109
    %111 = vdwg.mxu0
    %vm112 = vcmask 261120
    %v113 = vsel %vm112, %v107, 0.0
    %114 = vadd.xlane.f32.xlu0 %v113
    %v115 = vpop.xlane.xlu0 %114
    %v116 = vsel %vm112, %v110, 0.0
    %117 = vadd.xlane.f32.xlu0 %v116
    %v118 = vpop.xlane.xlu0 %117
    %v119 = vrcp.pop 32.0
    %v120 = vmul.f32 32.0, %v119
    %v121 = vsub.f32 1.0, %v120
    %v122 = vmul.f32 %v119, %v121
    %v123 = vadd.f32 %v119, %v122
    %vm124 = vweird.f32 %v119
    %v125 = vsel %vm124, %v119, %v123
    %v126 = vmul.f32 %v115, %v125
    %v127 = vmul.f32 %v118, %v125
    %v128 = vsub.f32 %v107, %v126
    %v129 = vsub.f32 %v110, %v127
    %v130 = vmul.f32 %v128, %v128
    %v131 = vmul.f32 %v129, %v129
    %v132 = vsel %vm112, %v130, 0.0
    %133 = vadd.xlane.f32.xlu0 %v132
    %v134 = vpop.xlane.xlu0 %133
    %v135 = vsel %vm112, %v131, 0.0
    %136 = vadd.xlane.f32.xlu0 %v135
    %v137 = vpop.xlane.xlu0 %136
    %v138 = vmul.f32 %v134, %v125
    %v139 = vmul.f32 %v137, %v125
    %v140 = vadd.f32 %v138, 1e-05
    %v141 = vadd.f32 %v139, 1e-05
    %v142 = vrsqrt.pop %v140
    %v143 = vmul.f32 %v142, %v140
    %v144 = vmul.f32 %v143, %v142
    %v145 = vmul.f32 0.5, %v144
    %v146 = vsub.f32 1.5, %v145
    %v147 = vmul.f32 %v142, %v146
    %vm148 = vweird.f32 %v140
    %vm149 = vweird.f32 %v142
    %vm150 = vmor %vm148, %vm149
    %v151 = vsel %vm150, %v142, %v147
    %v152 = vrsqrt.pop %v141
    %v153 = vmul.f32 %v152, %v141
    %v154 = vmul.f32 %v153, %v152
    %v155 = vmul.f32 0.5, %v154
    %v156 = vsub.f32 1.5, %v155
    %v157 = vmul.f32 %v152, %v156
    %vm158 = vweird.f32 %v141
    %vm159 = vweird.f32 %v152
    %vm160 = vmor %vm158, %vm159
    %v161 = vsel %vm160, %v152, %v157
    %v162 = vmul.f32 %v128, %v151
    %v163 = vmul.f32 %v129, %v161
    %v164 = vperm.slane %v70, 0
    %v165 = vmul.f32 %v162, %v164
    %v166 = vmul.f32 %v163, %v164
    %v167 = vperm.slane %v70, 1
    %v168 = vadd.f32 %v165, %v167
    %v169 = vadd.f32 %v166, %v167
    %v170 = vld [vmem:[#allocation5] sm:$0xff]
    %v171 = vld [vmem:[#allocation5 + $0x8] sm:$0xff]
    %v172 = vld [vmem:[#allocation5 + $0x10] sm:$0xff]
    %v173 = vld [vmem:[#allocation5 + $0x18] sm:$0xff]
    %v174 = vld [vmem:[#allocation7] sm:$0xff]
    %v175 = vld [vmem:[#allocation7 + $0x8] sm:$0xff]
    %v176 = vld [vmem:[#allocation7 + $0x10] sm:$0xff]
    %v177 = vld [vmem:[#allocation7 + $0x18] sm:$0xff]
    %v178 = vld [vmem:[#allocation7 + $0x20] sm:$0xff]
    %v179 = vld [vmem:[#allocation7 + $0x28] sm:$0xff]
    %v180 = vld [vmem:[#allocation7 + $0x30] sm:$0xff]
    %v181 = vld [vmem:[#allocation7 + $0x38] sm:$0xff]
    %v182 = vperm.slane %v70, 2
    %v184 = vsel %vm112, %v168, 0
    %v187 = vsel %vm112, %v169, 0
    %189 = vmatpush.msra.mxu0 0.0
    %190 = vmatpush.msra.mxu0 0.0
    %191 = vmatpush.msra.mxu0 0.0
    %192 = vmatpush.msra.mxu0 0.0
    %193 = vmatpush.msra.mxu0 0.0
    %194 = vmatpush.msra.mxu0 0.0
    %195 = vmatpush.msra.mxu0 0.0
    %196 = vmatpush.msra.mxu0 0.0
    %197 = vmatpush.msra.mxu0 0.0
    %198 = vmatpush.msra.mxu0 0.0
    %199 = vmatpush.msra.mxu0 0.0
    %200 = vmatpush.msra.mxu0 0.0
    %201 = vmatpush.msra.mxu0 %v173
    %202 = vmatpush.msra.mxu0 %v172
    %203 = vmatpush.msra.mxu0 %v171
    %204 = vmatpush.msra.mxu0 %v170
    %205 = vmatmul.f32.gmra.mxu0 %v184
    %v206 = vpop.f32.mrf.mxu0
    %v207 = vadd.f32 %v182, %v206
    %208 = vmatmul.f32.gmra.mxu0 %v187
    %v209 = vpop.f32.mrf.mxu0
    %v210 = vadd.f32 %v182, %v209
    %211 = vdwg.mxu0
    %213 = vrot.lane.b32.xlu0 %v207, 96
    %v214 = vpop.permute.xlu0 %213
    %vm215 = vcmask 64512
    %v216 = vsel %vm215, %v207, 0
    %v218 = vsel %vm215, %v214, 0
    %220 = vmatpush.xpose.msra.mxu0 0.0
    %221 = vmatpush.xpose.msra.mxu0 0.0
    %222 = vmatpush.xpose.msra.mxu0 0.0
    %223 = vmatpush.xpose.msra.mxu0 0.0
    %224 = vmatpush.xpose.msra.mxu0 0.0
    %225 = vmatpush.xpose.msra.mxu0 0.0
    %226 = vmatpush.xpose.msra.mxu0 0.0
    %227 = vmatpush.xpose.msra.mxu0 0.0
    %228 = vmatpush.xpose.msra.mxu0 0.0
    %229 = vmatpush.xpose.msra.mxu0 0.0
    %230 = vmatpush.xpose.msra.mxu0 0.0
    %231 = vmatpush.xpose.msra.mxu0 0.0
    %232 = vmatpush.xpose.msra.mxu0 0.0
    %233 = vmatpush.xpose.msra.mxu0 0.0
    %234 = vmatpush.xpose.msra.mxu0 0.0
    %235 = vmatpush.xpose.msra.mxu0 %v218
    %236 = vmatmul.f32.gmra.mxu0 %v216
    %v237 = vpop.f32.mrf.mxu0
    %v238 = vadd.f32 0.0, %v237
    %239 = vdwg.mxu0
    %241 = vrot.lane.b32.xlu0 %v210, 96
    %v242 = vpop.permute.xlu0 %241
    %v243 = vsel %vm215, %v210, 0
    %v245 = vsel %vm215, %v242, 0
    %247 = vmatpush.xpose.msra.mxu0 0.0
    %248 = vmatpush.xpose.msra.mxu0 0.0
    %249 = vmatpush.xpose.msra.mxu0 0.0
    %250 = vmatpush.xpose.msra.mxu0 0.0
    %251 = vmatpush.xpose.msra.mxu0 0.0
    %252 = vmatpush.xpose.msra.mxu0 0.0
    %253 = vmatpush.xpose.msra.mxu0 0.0
    %254 = vmatpush.xpose.msra.mxu0 0.0
    %255 = vmatpush.xpose.msra.mxu0 0.0
    %256 = vmatpush.xpose.msra.mxu0 0.0
    %257 = vmatpush.xpose.msra.mxu0 0.0
    %258 = vmatpush.xpose.msra.mxu0 0.0
    %259 = vmatpush.xpose.msra.mxu0 0.0
    %260 = vmatpush.xpose.msra.mxu0 0.0
    %261 = vmatpush.xpose.msra.mxu0 0.0
    %262 = vmatpush.xpose.msra.mxu0 %v245
    %263 = vmatmul.f32.gmra.mxu0 %v243
    %v264 = vpop.f32.mrf.mxu0
    %v265 = vadd.f32 0.0, %v264
    %266 = vdwg.mxu0
    %v267 = vsel %vm215, %v238, -inf
    %268 = vmax.xlane.f32.xlu0 %v267
    %v269 = vpop.xlane.xlu0 %268
    %v270 = vsel %vm215, %v265, -inf
    %271 = vmax.xlane.f32.xlu0 %v270
    %v272 = vpop.xlane.xlu0 %271
    %v273 = vsub.f32 %v238, %v269
    %v274 = vsub.f32 %v265, %v272
    %v275 = vmul.f32 %v273, 1.442695
    %v276 = vpow.pop %v275
    %v277 = vmul.f32 %v274, 1.442695
    %v278 = vpow.pop %v277
    %v279 = vsel %vm215, %v276, 0.0
    %280 = vadd.xlane.f32.xlu0 %v279
    %v281 = vpop.xlane.xlu0 %280
    %v282 = vsel %vm215, %v278, 0.0
    %283 = vadd.xlane.f32.xlu0 %v282
    %v284 = vpop.xlane.xlu0 %283
    %v285 = vrcp.pop %v281
    %v286 = vrcp.pop %v284
    %v287 = vmul.f32 %v276, %v285
    %v288 = vmul.f32 %v278, %v286
    %289 = vrot.lane.b32.xlu0 %v207, 64
    %v290 = vpop.permute.xlu0 %289
    %v293 = vsel %vm215, %v287, 0
    %295 = vmatpush.msra.mxu0 0.0
    %296 = vmatpush.msra.mxu0 0.0
    %297 = vmatpush.msra.mxu0 0.0
    %298 = vmatpush.msra.mxu0 0.0
    %299 = vmatpush.msra.mxu0 0.0
    %300 = vmatpush.msra.mxu0 0.0
    %301 = vmatpush.msra.mxu0 0.0
    %302 = vmatpush.msra.mxu0 0.0
    %303 = vmatpush.msra.mxu0 0.0
    %304 = vmatpush.msra.mxu0 0.0
    %305 = vmatpush.msra.mxu0 0.0
    %306 = vmatpush.msra.mxu0 0.0
    %307 = vmatpush.msra.mxu0 0.0
    %308 = vmatpush.msra.mxu0 0.0
    %309 = vmatpush.msra.mxu0 0.0
    %310 = vmatpush.msra.mxu0 %v290
    %311 = vmatmul.f32.gmra.mxu0 %v293
    %v312 = vpop.f32.mrf.mxu0
    %v313 = vadd.f32 0.0, %v312
    %314 = vdwg.mxu0
    %315 = vrot.lane.b32.xlu0 %v210, 64
    %v316 = vpop.permute.xlu0 %315
    %v319 = vsel %vm215, %v288, 0
    %321 = vmatpush.msra.mxu0 0.0
    %322 = vmatpush.msra.mxu0 0.0
    %323 = vmatpush.msra.mxu0 0.0
    %324 = vmatpush.msra.mxu0 0.0
    %325 = vmatpush.msra.mxu0 0.0
    %326 = vmatpush.msra.mxu0 0.0
    %327 = vmatpush.msra.mxu0 0.0
    %328 = vmatpush.msra.mxu0 0.0
    %329 = vmatpush.msra.mxu0 0.0
    %330 = vmatpush.msra.mxu0 0.0
    %331 = vmatpush.msra.mxu0 0.0
    %332 = vmatpush.msra.mxu0 0.0
    %333 = vmatpush.msra.mxu0 0.0
    %334 = vmatpush.msra.mxu0 0.0
    %335 = vmatpush.msra.mxu0 0.0
    %336 = vmatpush.msra.mxu0 %v316
    %337 = vmatmul.f32.gmra.mxu0 %v319
    %v338 = vpop.f32.mrf.mxu0
    %v339 = vadd.f32 0.0, %v338
    %340 = vdwg.mxu0
    %341 = vrot.lane.b32.xlu0 %v207, 120
    %v342 = vpop.permute.xlu0 %341
    %343 = vrot.lane.b32.xlu0 %v207, 88
    %v344 = vpop.permute.xlu0 %343
    %v345 = vsel %vm215, %v342, 0
    %v347 = vsel %vm215, %v344, 0
    %349 = vmatpush.xpose.msra.mxu0 0.0
    %350 = vmatpush.xpose.msra.mxu0 0.0
    %351 = vmatpush.xpose.msra.mxu0 0.0
    %352 = vmatpush.xpose.msra.mxu0 0.0
    %353 = vmatpush.xpose.msra.mxu0 0.0
    %354 = vmatpush.xpose.msra.mxu0 0.0
    %355 = vmatpush.xpose.msra.mxu0 0.0
    %356 = vmatpush.xpose.msra.mxu0 0.0
    %357 = vmatpush.xpose.msra.mxu0 0.0
    %358 = vmatpush.xpose.msra.mxu0 0.0
    %359 = vmatpush.xpose.msra.mxu0 0.0
    %360 = vmatpush.xpose.msra.mxu0 0.0
    %361 = vmatpush.xpose.msra.mxu0 0.0
    %362 = vmatpush.xpose.msra.mxu0 0.0
    %363 = vmatpush.xpose.msra.mxu0 0.0
    %364 = vmatpush.xpose.msra.mxu0 %v347
    %365 = vmatmul.f32.gmra.mxu0 %v345
    %v366 = vpop.f32.mrf.mxu0
    %v367 = vadd.f32 0.0, %v366
    %368 = vdwg.mxu0
    %369 = vrot.lane.b32.xlu0 %v210, 120
    %v370 = vpop.permute.xlu0 %369
    %371 = vrot.lane.b32.xlu0 %v210, 88
    %v372 = vpop.permute.xlu0 %371
    %v373 = vsel %vm215, %v370, 0
    %v375 = vsel %vm215, %v372, 0
    %377 = vmatpush.xpose.msra.mxu0 0.0
    %378 = vmatpush.xpose.msra.mxu0 0.0
    %379 = vmatpush.xpose.msra.mxu0 0.0
    %380 = vmatpush.xpose.msra.mxu0 0.0
    %381 = vmatpush.xpose.msra.mxu0 0.0
    %382 = vmatpush.xpose.msra.mxu0 0.0
    %383 = vmatpush.xpose.msra.mxu0 0.0
    %384 = vmatpush.xpose.msra.mxu0 0.0
    %385 = vmatpush.xpose.msra.mxu0 0.0
    %386 = vmatpush.xpose.msra.mxu0 0.0
    %387 = vmatpush.xpose.msra.mxu0 0.0
    %388 = vmatpush.xpose.msra.mxu0 0.0
    %389 = vmatpush.xpose.msra.mxu0 0.0
    %390 = vmatpush.xpose.msra.mxu0 0.0
    %391 = vmatpush.xpose.msra.mxu0 0.0
    %392 = vmatpush.xpose.msra.mxu0 %v375
    %393 = vmatmul.f32.gmra.mxu0 %v373
    %v394 = vpop.f32.mrf.mxu0
    %v395 = vadd.f32 0.0, %v394
    %396 = vdwg.mxu0
    %v397 = vsel %vm215, %v367, -inf
    %398 = vmax.xlane.f32.xlu0 %v397
    %v399 = vpop.xlane.xlu0 %398
    %v400 = vsel %vm215, %v395, -inf
    %401 = vmax.xlane.f32.xlu0 %v400
    %v402 = vpop.xlane.xlu0 %401
    %v403 = vsub.f32 %v367, %v399
    %v404 = vsub.f32 %v395, %v402
    %v405 = vmul.f32 %v403, 1.442695
    %v406 = vpow.pop %v405
    %v407 = vmul.f32 %v404, 1.442695
    %v408 = vpow.pop %v407
    %v409 = vsel %vm215, %v406, 0.0
    %410 = vadd.xlane.f32.xlu0 %v409
    %v411 = vpop.xlane.xlu0 %410
    %v412 = vsel %vm215, %v408, 0.0
    %413 = vadd.xlane.f32.xlu0 %v412
    %v414 = vpop.xlane.xlu0 %413
    %v415 = vrcp.pop %v411
    %v416 = vrcp.pop %v414
    %v417 = vmul.f32 %v406, %v415
    %v418 = vmul.f32 %v408, %v416
    %419 = vrot.lane.b32.xlu0 %v207, 56
    %v420 = vpop.permute.xlu0 %419
    %v423 = vsel %vm215, %v417, 0
    %425 = vmatpush.msra.mxu0 0.0
    %426 = vmatpush.msra.mxu0 0.0
    %427 = vmatpush.msra.mxu0 0.0
    %428 = vmatpush.msra.mxu0 0.0
    %429 = vmatpush.msra.mxu0 0.0
    %430 = vmatpush.msra.mxu0 0.0
    %431 = vmatpush.msra.mxu0 0.0
    %432 = vmatpush.msra.mxu0 0.0
    %433 = vmatpush.msra.mxu0 0.0
    %434 = vmatpush.msra.mxu0 0.0
    %435 = vmatpush.msra.mxu0 0.0
    %436 = vmatpush.msra.mxu0 0.0
    %437 = vmatpush.msra.mxu0 0.0
    %438 = vmatpush.msra.mxu0 0.0
    %439 = vmatpush.msra.mxu0 0.0
    %440 = vmatpush.msra.mxu0 %v420
    %441 = vmatmul.f32.gmra.mxu0 %v423
    %v442 = vpop.f32.mrf.mxu0
    %v443 = vadd.f32 0.0, %v442
    %444 = vdwg.mxu0
    %445 = vrot.lane.b32.xlu0 %v210, 56
    %v446 = vpop.permute.xlu0 %445
    %v449 = vsel %vm215, %v418, 0
    %451 = vmatpush.msra.mxu0 0.0
    %452 = vmatpush.msra.mxu0 0.0
    %453 = vmatpush.msra.mxu0 0.0
    %454 = vmatpush.msra.mxu0 0.0
    %455 = vmatpush.msra.mxu0 0.0
    %456 = vmatpush.msra.mxu0 0.0
    %457 = vmatpush.msra.mxu0 0.0
    %458 = vmatpush.msra.mxu0 0.0
    %459 = vmatpush.msra.mxu0 0.0
    %460 = vmatpush.msra.mxu0 0.0
    %461 = vmatpush.msra.mxu0 0.0
    %462 = vmatpush.msra.mxu0 0.0
    %463 = vmatpush.msra.mxu0 0.0
    %464 = vmatpush.msra.mxu0 0.0
    %465 = vmatpush.msra.mxu0 0.0
    %466 = vmatpush.msra.mxu0 %v446
    %467 = vmatmul.f32.gmra.mxu0 %v449
    %v468 = vpop.f32.mrf.mxu0
    %v469 = vadd.f32 0.0, %v468
    %470 = vdwg.mxu0
    %471 = vrot.lane.b32.xlu0 %v207, 112
    %v472 = vpop.permute.xlu0 %471
    %473 = vrot.lane.b32.xlu0 %v207, 80
    %v474 = vpop.permute.xlu0 %473
    %v475 = vsel %vm215, %v472, 0
    %v477 = vsel %vm215, %v474, 0
    %479 = vmatpush.xpose.msra.mxu0 0.0
    %480 = vmatpush.xpose.msra.mxu0 0.0
    %481 = vmatpush.xpose.msra.mxu0 0.0
    %482 = vmatpush.xpose.msra.mxu0 0.0
    %483 = vmatpush.xpose.msra.mxu0 0.0
    %484 = vmatpush.xpose.msra.mxu0 0.0
    %485 = vmatpush.xpose.msra.mxu0 0.0
    %486 = vmatpush.xpose.msra.mxu0 0.0
    %487 = vmatpush.xpose.msra.mxu0 0.0
    %488 = vmatpush.xpose.msra.mxu0 0.0
    %489 = vmatpush.xpose.msra.mxu0 0.0
    %490 = vmatpush.xpose.msra.mxu0 0.0
    %491 = vmatpush.xpose.msra.mxu0 0.0
    %492 = vmatpush.xpose.msra.mxu0 0.0
    %493 = vmatpush.xpose.msra.mxu0 0.0
    %494 = vmatpush.xpose.msra.mxu0 %v477
    %495 = vmatmul.f32.gmra.mxu0 %v475
    %v496 = vpop.f32.mrf.mxu0
    %v497 = vadd.f32 0.0, %v496
    %498 = vdwg.mxu0
    %499 = vrot.lane.b32.xlu0 %v210, 112
    %v500 = vpop.permute.xlu0 %499
    %501 = vrot.lane.b32.xlu0 %v210, 80
    %v502 = vpop.permute.xlu0 %501
    %v503 = vsel %vm215, %v500, 0
    %v505 = vsel %vm215, %v502, 0
    %507 = vmatpush.xpose.msra.mxu0 0.0
    %508 = vmatpush.xpose.msra.mxu0 0.0
    %509 = vmatpush.xpose.msra.mxu0 0.0
    %510 = vmatpush.xpose.msra.mxu0 0.0
    %511 = vmatpush.xpose.msra.mxu0 0.0
    %512 = vmatpush.xpose.msra.mxu0 0.0
    %513 = vmatpush.xpose.msra.mxu0 0.0
    %514 = vmatpush.xpose.msra.mxu0 0.0
    %515 = vmatpush.xpose.msra.mxu0 0.0
    %516 = vmatpush.xpose.msra.mxu0 0.0
    %517 = vmatpush.xpose.msra.mxu0 0.0
    %518 = vmatpush.xpose.msra.mxu0 0.0
    %519 = vmatpush.xpose.msra.mxu0 0.0
    %520 = vmatpush.xpose.msra.mxu0 0.0
    %521 = vmatpush.xpose.msra.mxu0 0.0
    %522 = vmatpush.xpose.msra.mxu0 %v505
    %523 = vmatmul.f32.gmra.mxu0 %v503
    %v524 = vpop.f32.mrf.mxu0
    %v525 = vadd.f32 0.0, %v524
    %526 = vdwg.mxu0
    %v527 = vsel %vm215, %v497, -inf
    %528 = vmax.xlane.f32.xlu0 %v527
    %v529 = vpop.xlane.xlu0 %528
    %v530 = vsel %vm215, %v525, -inf
    %531 = vmax.xlane.f32.xlu0 %v530
    %v532 = vpop.xlane.xlu0 %531
    %v533 = vsub.f32 %v497, %v529
    %v534 = vsub.f32 %v525, %v532
    %v535 = vmul.f32 %v533, 1.442695
    %v536 = vpow.pop %v535
    %v537 = vmul.f32 %v534, 1.442695
    %v538 = vpow.pop %v537
    %v539 = vsel %vm215, %v536, 0.0
    %540 = vadd.xlane.f32.xlu0 %v539
    %v541 = vpop.xlane.xlu0 %540
    %v542 = vsel %vm215, %v538, 0.0
    %543 = vadd.xlane.f32.xlu0 %v542
    %v544 = vpop.xlane.xlu0 %543
    %v545 = vrcp.pop %v541
    %v546 = vrcp.pop %v544
    %v547 = vmul.f32 %v536, %v545
    %v548 = vmul.f32 %v538, %v546
    %549 = vrot.lane.b32.xlu0 %v207, 48
    %v550 = vpop.permute.xlu0 %549
    %v553 = vsel %vm215, %v547, 0
    %555 = vmatpush.msra.mxu0 0.0
    %556 = vmatpush.msra.mxu0 0.0
    %557 = vmatpush.msra.mxu0 0.0
    %558 = vmatpush.msra.mxu0 0.0
    %559 = vmatpush.msra.mxu0 0.0
    %560 = vmatpush.msra.mxu0 0.0
    %561 = vmatpush.msra.mxu0 0.0
    %562 = vmatpush.msra.mxu0 0.0
    %563 = vmatpush.msra.mxu0 0.0
    %564 = vmatpush.msra.mxu0 0.0
    %565 = vmatpush.msra.mxu0 0.0
    %566 = vmatpush.msra.mxu0 0.0
    %567 = vmatpush.msra.mxu0 0.0
    %568 = vmatpush.msra.mxu0 0.0
    %569 = vmatpush.msra.mxu0 0.0
    %570 = vmatpush.msra.mxu0 %v550
    %571 = vmatmul.f32.gmra.mxu0 %v553
    %v572 = vpop.f32.mrf.mxu0
    %v573 = vadd.f32 0.0, %v572
    %574 = vdwg.mxu0
    %575 = vrot.lane.b32.xlu0 %v210, 48
    %v576 = vpop.permute.xlu0 %575
    %v579 = vsel %vm215, %v548, 0
    %581 = vmatpush.msra.mxu0 0.0
    %582 = vmatpush.msra.mxu0 0.0
    %583 = vmatpush.msra.mxu0 0.0
    %584 = vmatpush.msra.mxu0 0.0
    %585 = vmatpush.msra.mxu0 0.0
    %586 = vmatpush.msra.mxu0 0.0
    %587 = vmatpush.msra.mxu0 0.0
    %588 = vmatpush.msra.mxu0 0.0
    %589 = vmatpush.msra.mxu0 0.0
    %590 = vmatpush.msra.mxu0 0.0
    %591 = vmatpush.msra.mxu0 0.0
    %592 = vmatpush.msra.mxu0 0.0
    %593 = vmatpush.msra.mxu0 0.0
    %594 = vmatpush.msra.mxu0 0.0
    %595 = vmatpush.msra.mxu0 0.0
    %596 = vmatpush.msra.mxu0 %v576
    %597 = vmatmul.f32.gmra.mxu0 %v579
    %v598 = vpop.f32.mrf.mxu0
    %v599 = vadd.f32 0.0, %v598
    %600 = vdwg.mxu0
    %601 = vrot.lane.b32.xlu0 %v207, 104
    %v602 = vpop.permute.xlu0 %601
    %603 = vrot.lane.b32.xlu0 %v207, 72
    %v604 = vpop.permute.xlu0 %603
    %v605 = vsel %vm215, %v602, 0
    %v607 = vsel %vm215, %v604, 0
    %609 = vmatpush.xpose.msra.mxu0 0.0
    %610 = vmatpush.xpose.msra.mxu0 0.0
    %611 = vmatpush.xpose.msra.mxu0 0.0
    %612 = vmatpush.xpose.msra.mxu0 0.0
    %613 = vmatpush.xpose.msra.mxu0 0.0
    %614 = vmatpush.xpose.msra.mxu0 0.0
    %615 = vmatpush.xpose.msra.mxu0 0.0
    %616 = vmatpush.xpose.msra.mxu0 0.0
    %617 = vmatpush.xpose.msra.mxu0 0.0
    %618 = vmatpush.xpose.msra.mxu0 0.0
    %619 = vmatpush.xpose.msra.mxu0 0.0
    %620 = vmatpush.xpose.msra.mxu0 0.0
    %621 = vmatpush.xpose.msra.mxu0 0.0
    %622 = vmatpush.xpose.msra.mxu0 0.0
    %623 = vmatpush.xpose.msra.mxu0 0.0
    %624 = vmatpush.xpose.msra.mxu0 %v607
    %625 = vmatmul.f32.gmra.mxu0 %v605
    %v626 = vpop.f32.mrf.mxu0
    %v627 = vadd.f32 0.0, %v626
    %628 = vdwg.mxu0
    %629 = vrot.lane.b32.xlu0 %v210, 104
    %v630 = vpop.permute.xlu0 %629
    %631 = vrot.lane.b32.xlu0 %v210, 72
    %v632 = vpop.permute.xlu0 %631
    %v633 = vsel %vm215, %v630, 0
    %v635 = vsel %vm215, %v632, 0
    %637 = vmatpush.xpose.msra.mxu0 0.0
    %638 = vmatpush.xpose.msra.mxu0 0.0
    %639 = vmatpush.xpose.msra.mxu0 0.0
    %640 = vmatpush.xpose.msra.mxu0 0.0
    %641 = vmatpush.xpose.msra.mxu0 0.0
    %642 = vmatpush.xpose.msra.mxu0 0.0
    %643 = vmatpush.xpose.msra.mxu0 0.0
    %644 = vmatpush.xpose.msra.mxu0 0.0
    %645 = vmatpush.xpose.msra.mxu0 0.0
    %646 = vmatpush.xpose.msra.mxu0 0.0
    %647 = vmatpush.xpose.msra.mxu0 0.0
    %648 = vmatpush.xpose.msra.mxu0 0.0
    %649 = vmatpush.xpose.msra.mxu0 0.0
    %650 = vmatpush.xpose.msra.mxu0 0.0
    %651 = vmatpush.xpose.msra.mxu0 0.0
    %652 = vmatpush.xpose.msra.mxu0 %v635
    %653 = vmatmul.f32.gmra.mxu0 %v633
    %v654 = vpop.f32.mrf.mxu0
    %v655 = vadd.f32 0.0, %v654
    %656 = vdwg.mxu0
    %v657 = vsel %vm215, %v627, -inf
    %658 = vmax.xlane.f32.xlu0 %v657
    %v659 = vpop.xlane.xlu0 %658
    %v660 = vsel %vm215, %v655, -inf
    %661 = vmax.xlane.f32.xlu0 %v660
    %v662 = vpop.xlane.xlu0 %661
    %v663 = vsub.f32 %v627, %v659
    %v664 = vsub.f32 %v655, %v662
    %v665 = vmul.f32 %v663, 1.442695
    %v666 = vpow.pop %v665
    %v667 = vmul.f32 %v664, 1.442695
    %v668 = vpow.pop %v667
    %v669 = vsel %vm215, %v666, 0.0
    %670 = vadd.xlane.f32.xlu0 %v669
    %v671 = vpop.xlane.xlu0 %670
    %v672 = vsel %vm215, %v668, 0.0
    %673 = vadd.xlane.f32.xlu0 %v672
    %v674 = vpop.xlane.xlu0 %673
    %v675 = vrcp.pop %v671
    %v676 = vrcp.pop %v674
    %v677 = vmul.f32 %v666, %v675
    %v678 = vmul.f32 %v668, %v676
    %679 = vrot.lane.b32.xlu0 %v207, 40
    %v680 = vpop.permute.xlu0 %679
    %v683 = vsel %vm215, %v677, 0
    %685 = vmatpush.msra.mxu0 0.0
    %686 = vmatpush.msra.mxu0 0.0
    %687 = vmatpush.msra.mxu0 0.0
    %688 = vmatpush.msra.mxu0 0.0
    %689 = vmatpush.msra.mxu0 0.0
    %690 = vmatpush.msra.mxu0 0.0
    %691 = vmatpush.msra.mxu0 0.0
    %692 = vmatpush.msra.mxu0 0.0
    %693 = vmatpush.msra.mxu0 0.0
    %694 = vmatpush.msra.mxu0 0.0
    %695 = vmatpush.msra.mxu0 0.0
    %696 = vmatpush.msra.mxu0 0.0
    %697 = vmatpush.msra.mxu0 0.0
    %698 = vmatpush.msra.mxu0 0.0
    %699 = vmatpush.msra.mxu0 0.0
    %700 = vmatpush.msra.mxu0 %v680
    %701 = vmatmul.f32.gmra.mxu0 %v683
    %v702 = vpop.f32.mrf.mxu0
    %v703 = vadd.f32 0.0, %v702
    %704 = vdwg.mxu0
    %705 = vrot.lane.b32.xlu0 %v210, 40
    %v706 = vpop.permute.xlu0 %705
    %v709 = vsel %vm215, %v678, 0
    %711 = vmatpush.msra.mxu0 0.0
    %712 = vmatpush.msra.mxu0 0.0
    %713 = vmatpush.msra.mxu0 0.0
    %714 = vmatpush.msra.mxu0 0.0
    %715 = vmatpush.msra.mxu0 0.0
    %716 = vmatpush.msra.mxu0 0.0
    %717 = vmatpush.msra.mxu0 0.0
    %718 = vmatpush.msra.mxu0 0.0
    %719 = vmatpush.msra.mxu0 0.0
    %720 = vmatpush.msra.mxu0 0.0
    %721 = vmatpush.msra.mxu0 0.0
    %722 = vmatpush.msra.mxu0 0.0
    %723 = vmatpush.msra.mxu0 0.0
    %724 = vmatpush.msra.mxu0 0.0
    %725 = vmatpush.msra.mxu0 0.0
    %726 = vmatpush.msra.mxu0 %v706
    %727 = vmatmul.f32.gmra.mxu0 %v709
    %v728 = vpop.f32.mrf.mxu0
    %v729 = vadd.f32 0.0, %v728
    %730 = vdwg.mxu0
    %733 = vrot.lane.b32.xlu0 %v443, 8
    %v734 = vpop.permute.xlu0 %733
    %735 = vrot.lane.b32.xlu0 %v469, 8
    %v736 = vpop.permute.xlu0 %735
    %741 = vrot.lane.b32.xlu0 %v573, 16
    %v742 = vpop.permute.xlu0 %741
    %743 = vrot.lane.b32.xlu0 %v599, 16
    %v744 = vpop.permute.xlu0 %743
    %749 = vrot.lane.b32.xlu0 %v703, 24
    %v750 = vpop.permute.xlu0 %749
    %751 = vrot.lane.b32.xlu0 %v729, 24
    %v752 = vpop.permute.xlu0 %751
    %v755 = vsel %vm215, %v313, %v734
    %v756 = vsel %vm215, %v339, %v736
    %vm757 = vcmask 130048
    %v758 = vsel %vm757, %v755, %v742
    %v759 = vsel %vm757, %v756, %v744
    %vm760 = vcmask 195584
    %v761 = vsel %vm760, %v758, %v750
    %v762 = vsel %vm760, %v759, %v752
    %v763 = vperm.slane %v70, 3
    %768 = vrot.lane.b32.xlu0 %v170, 32
    %v769 = vpop.permute.xlu0 %768
    %770 = vrot.lane.b32.xlu0 %v171, 32
    %v771 = vpop.permute.xlu0 %770
    %772 = vrot.lane.b32.xlu0 %v172, 32
    %v773 = vpop.permute.xlu0 %772
    %774 = vrot.lane.b32.xlu0 %v173, 32
    %v775 = vpop.permute.xlu0 %774
    %v781 = vsel %vm112, %v761, 0
    %v784 = vsel %vm112, %v762, 0
    %786 = vmatpush.msra.mxu0 0.0
    %787 = vmatpush.msra.mxu0 0.0
    %788 = vmatpush.msra.mxu0 0.0
    %789 = vmatpush.msra.mxu0 0.0
    %790 = vmatpush.msra.mxu0 0.0
    %791 = vmatpush.msra.mxu0 0.0
    %792 = vmatpush.msra.mxu0 0.0
    %793 = vmatpush.msra.mxu0 0.0
    %794 = vmatpush.msra.mxu0 0.0
    %795 = vmatpush.msra.mxu0 0.0
    %796 = vmatpush.msra.mxu0 0.0
    %797 = vmatpush.msra.mxu0 0.0
    %798 = vmatpush.msra.mxu0 %v775
    %799 = vmatpush.msra.mxu0 %v773
    %800 = vmatpush.msra.mxu0 %v771
    %801 = vmatpush.msra.mxu0 %v769
    %802 = vmatmul.f32.gmra.mxu0 %v781
    %v803 = vpop.f32.mrf.mxu0
    %v804 = vadd.f32 %v763, %v803
    %805 = vmatmul.f32.gmra.mxu0 %v784
    %v806 = vpop.f32.mrf.mxu0
    %v807 = vadd.f32 %v763, %v806
    %808 = vdwg.mxu0
    %v809 = vadd.f32 %v168, %v804
    %v810 = vadd.f32 %v169, %v807
    %v811 = vsel %vm112, %v809, 0.0
    %812 = vadd.xlane.f32.xlu0 %v811
    %v813 = vpop.xlane.xlu0 %812
    %v814 = vsel %vm112, %v810, 0.0
    %815 = vadd.xlane.f32.xlu0 %v814
    %v816 = vpop.xlane.xlu0 %815
    %v817 = vmul.f32 %v813, %v125
    %v818 = vmul.f32 %v816, %v125
    %v819 = vsub.f32 %v809, %v817
    %v820 = vsub.f32 %v810, %v818
    %v821 = vmul.f32 %v819, %v819
    %v822 = vmul.f32 %v820, %v820
    %v823 = vsel %vm112, %v821, 0.0
    %824 = vadd.xlane.f32.xlu0 %v823
    %v825 = vpop.xlane.xlu0 %824
    %v826 = vsel %vm112, %v822, 0.0
    %827 = vadd.xlane.f32.xlu0 %v826
    %v828 = vpop.xlane.xlu0 %827
    %v829 = vmul.f32 %v825, %v125
    %v830 = vmul.f32 %v828, %v125
    %v831 = vadd.f32 %v829, 1e-05
    %v832 = vadd.f32 %v830, 1e-05
    %v833 = vrsqrt.pop %v831
    %v834 = vmul.f32 %v833, %v831
    %v835 = vmul.f32 %v834, %v833
    %v836 = vmul.f32 0.5, %v835
    %v837 = vsub.f32 1.5, %v836
    %v838 = vmul.f32 %v833, %v837
    %vm839 = vweird.f32 %v831
    %vm840 = vweird.f32 %v833
    %vm841 = vmor %vm839, %vm840
    %v842 = vsel %vm841, %v833, %v838
    %v843 = vrsqrt.pop %v832
    %v844 = vmul.f32 %v843, %v832
    %v845 = vmul.f32 %v844, %v843
    %v846 = vmul.f32 0.5, %v845
    %v847 = vsub.f32 1.5, %v846
    %v848 = vmul.f32 %v843, %v847
    %vm849 = vweird.f32 %v832
    %vm850 = vweird.f32 %v843
    %vm851 = vmor %vm849, %vm850
    %v852 = vsel %vm851, %v843, %v848
    %v853 = vmul.f32 %v819, %v842
    %v854 = vmul.f32 %v820, %v852
    %v855 = vperm.slane %v70, 4
    %v856 = vmul.f32 %v853, %v855
    %v857 = vmul.f32 %v854, %v855
    %v858 = vperm.slane %v70, 5
    %v859 = vadd.f32 %v856, %v858
    %v860 = vadd.f32 %v857, %v858
    %v861 = vperm.slane %v70, 6
    %v863 = vsel %vm112, %v859, 0
    %v866 = vsel %vm112, %v860, 0
    %868 = vmatpush.msra.mxu0 0.0
    %869 = vmatpush.msra.mxu0 0.0
    %870 = vmatpush.msra.mxu0 0.0
    %871 = vmatpush.msra.mxu0 0.0
    %872 = vmatpush.msra.mxu0 0.0
    %873 = vmatpush.msra.mxu0 0.0
    %874 = vmatpush.msra.mxu0 0.0
    %875 = vmatpush.msra.mxu0 0.0
    %876 = vmatpush.msra.mxu0 0.0
    %877 = vmatpush.msra.mxu0 0.0
    %878 = vmatpush.msra.mxu0 0.0
    %879 = vmatpush.msra.mxu0 0.0
    %880 = vmatpush.msra.mxu0 %v177
    %881 = vmatpush.msra.mxu0 %v176
    %882 = vmatpush.msra.mxu0 %v175
    %883 = vmatpush.msra.mxu0 %v174
    %884 = vmatmul.f32.gmra.mxu0 %v863
    %v885 = vpop.f32.mrf.mxu0
    %v886 = vadd.f32 %v861, %v885
    %887 = vmatmul.f32.gmra.mxu0 %v866
    %v888 = vpop.f32.mrf.mxu0
    %v889 = vadd.f32 %v861, %v888
    %890 = vdwg.mxu0
    %v891 = vmul.f32 %v886, %v886
    %v892 = vmul.f32 %v889, %v889
    %v893 = vmul.f32 %v886, %v891
    %v894 = vmul.f32 %v889, %v892
    %v895 = vmul.f32 %v893, 0.044715
    %v896 = vmul.f32 %v894, 0.044715
    %v897 = vadd.f32 %v886, %v895
    %v898 = vadd.f32 %v889, %v896
    %v899 = vmul.f32 %v897, 0.7978846
    %v900 = vmul.f32 %v898, 0.7978846
    %v901 = vtanh.pop %v899
    %v902 = vtanh.pop %v900
    %v903 = vadd.f32 %v901, 1.0
    %v904 = vadd.f32 %v902, 1.0
    %v905 = vmul.f32 %v903, 0.5
    %v906 = vmul.f32 %v904, 0.5
    %v907 = vmul.f32 %v886, %v905
    %v908 = vmul.f32 %v889, %v906
    %v909 = vperm.slane %v70, 7
    %910 = vmatpush.xpose.msra.mxu0 0.0
    %911 = vmatpush.xpose.msra.mxu0 0.0
    %912 = vmatpush.xpose.msra.mxu0 0.0
    %913 = vmatpush.xpose.msra.mxu0 0.0
    %914 = vmatpush.xpose.msra.mxu0 0.0
    %915 = vmatpush.xpose.msra.mxu0 0.0
    %916 = vmatpush.xpose.msra.mxu0 0.0
    %917 = vmatpush.xpose.msra.mxu0 0.0
    %918 = vmatpush.xpose.msra.mxu0 0.0
    %919 = vmatpush.xpose.msra.mxu0 0.0
    %920 = vmatpush.xpose.msra.mxu0 0.0
    %921 = vmatpush.xpose.msra.mxu0 0.0
    %922 = vmatpush.xpose.msra.mxu0 %v181
    %923 = vmatpush.xpose.msra.mxu0 %v180
    %924 = vmatpush.xpose.msra.mxu0 %v179
    %925 = vmatpush.xpose.msra.mxu0 %v178
    %926 = vmatmul.f32.gmra.mxu0 %v907
    %v927 = vpop.f32.mrf.mxu0
    %v928 = vadd.f32 %v909, %v927
    %929 = vmatmul.f32.gmra.mxu0 %v908
    %v930 = vpop.f32.mrf.mxu0
    %v931 = vadd.f32 %v909, %v930
    %932 = vdwg.mxu0
    %v933 = vadd.f32 %v859, %v928
    %v934 = vadd.f32 %v860, %v931
    %v935 = vsel %vm112, %v933, 0.0
    %936 = vadd.xlane.f32.xlu0 %v935
    %v937 = vpop.xlane.xlu0 %936
    %v938 = vsel %vm112, %v934, 0.0
    %939 = vadd.xlane.f32.xlu0 %v938
    %v940 = vpop.xlane.xlu0 %939
    %v941 = vmul.f32 %v937, %v125
    %v942 = vmul.f32 %v940, %v125
    %v943 = vsub.f32 %v933, %v941
    %v944 = vsub.f32 %v934, %v942
    %v945 = vmul.f32 %v943, %v943
    %v946 = vmul.f32 %v944, %v944
    %v947 = vsel %vm112, %v945, 0.0
    %948 = vadd.xlane.f32.xlu0 %v947
    %v949 = vpop.xlane.xlu0 %948
    %v950 = vsel %vm112, %v946, 0.0
    %951 = vadd.xlane.f32.xlu0 %v950
    %v952 = vpop.xlane.xlu0 %951
    %v953 = vmul.f32 %v949, %v125
    %v954 = vmul.f32 %v952, %v125
    %v955 = vadd.f32 %v953, 1e-05
    %v956 = vadd.f32 %v954, 1e-05
    %v957 = vrsqrt.pop %v955
    %v958 = vmul.f32 %v957, %v955
    %v959 = vmul.f32 %v958, %v957
    %v960 = vmul.f32 0.5, %v959
    %v961 = vsub.f32 1.5, %v960
    %v962 = vmul.f32 %v957, %v961
    %vm963 = vweird.f32 %v955
    %vm964 = vweird.f32 %v957
    %vm965 = vmor %vm963, %vm964
    %v966 = vsel %vm965, %v957, %v962
    %v967 = vrsqrt.pop %v956
    %v968 = vmul.f32 %v967, %v956
    %v969 = vmul.f32 %v968, %v967
    %v970 = vmul.f32 0.5, %v969
    %v971 = vsub.f32 1.5, %v970
    %v972 = vmul.f32 %v967, %v971
    %vm973 = vweird.f32 %v956
    %vm974 = vweird.f32 %v967
    %vm975 = vmor %vm973, %vm974
    %v976 = vsel %vm975, %v967, %v972
    %v977 = vmul.f32 %v943, %v966
    %v978 = vmul.f32 %v944, %v976
    %v979 = vperm.slane %v71, 0
    %v980 = vmul.f32 %v977, %v979
    %v981 = vmul.f32 %v978, %v979
    %v982 = vperm.slane %v71, 1
    %v983 = vadd.f32 %v980, %v982
    %v984 = vadd.f32 %v981, %v982
    %s985 = scalar_lea.vmem [#allocation5], 32
    %v986 = vld [vmem:[%s985] sm:$0xff]
    %v987 = vld [vmem:[%s985 + $0x8] sm:$0xff]
    %v988 = vld [vmem:[%s985 + $0x10] sm:$0xff]
    %v989 = vld [vmem:[%s985 + $0x18] sm:$0xff]
    %s990 = scalar_lea.vmem [#allocation7], 64
    %v991 = vld [vmem:[%s990] sm:$0xff]
    %v992 = vld [vmem:[%s990 + $0x8] sm:$0xff]
    %v993 = vld [vmem:[%s990 + $0x10] sm:$0xff]
    %v994 = vld [vmem:[%s990 + $0x18] sm:$0xff]
    %v995 = vld [vmem:[%s990 + $0x20] sm:$0xff]
    %v996 = vld [vmem:[%s990 + $0x28] sm:$0xff]
    %v997 = vld [vmem:[%s990 + $0x30] sm:$0xff]
    %v998 = vld [vmem:[%s990 + $0x38] sm:$0xff]
    %v999 = vperm.slane %v71, 2
    %v1001 = vsel %vm112, %v983, 0
    %v1004 = vsel %vm112, %v984, 0
    %1006 = vmatpush.msra.mxu0 0.0
    %1007 = vmatpush.msra.mxu0 0.0
    %1008 = vmatpush.msra.mxu0 0.0
    %1009 = vmatpush.msra.mxu0 0.0
    %1010 = vmatpush.msra.mxu0 0.0
    %1011 = vmatpush.msra.mxu0 0.0
    %1012 = vmatpush.msra.mxu0 0.0
    %1013 = vmatpush.msra.mxu0 0.0
    %1014 = vmatpush.msra.mxu0 0.0
    %1015 = vmatpush.msra.mxu0 0.0
    %1016 = vmatpush.msra.mxu0 0.0
    %1017 = vmatpush.msra.mxu0 0.0
    %1018 = vmatpush.msra.mxu0 %v989
    %1019 = vmatpush.msra.mxu0 %v988
    %1020 = vmatpush.msra.mxu0 %v987
    %1021 = vmatpush.msra.mxu0 %v986
    %1022 = vmatmul.f32.gmra.mxu0 %v1001
    %v1023 = vpop.f32.mrf.mxu0
    %v1024 = vadd.f32 %v999, %v1023
    %1025 = vmatmul.f32.gmra.mxu0 %v1004
    %v1026 = vpop.f32.mrf.mxu0
    %v1027 = vadd.f32 %v999, %v1026
    %1028 = vdwg.mxu0
    %1030 = vrot.lane.b32.xlu0 %v1024, 96
    %v1031 = vpop.permute.xlu0 %1030
    %v1032 = vsel %vm215, %v1024, 0
    %v1034 = vsel %vm215, %v1031, 0
    %1036 = vmatpush.xpose.msra.mxu0 0.0
    %1037 = vmatpush.xpose.msra.mxu0 0.0
    %1038 = vmatpush.xpose.msra.mxu0 0.0
    %1039 = vmatpush.xpose.msra.mxu0 0.0
    %1040 = vmatpush.xpose.msra.mxu0 0.0
    %1041 = vmatpush.xpose.msra.mxu0 0.0
    %1042 = vmatpush.xpose.msra.mxu0 0.0
    %1043 = vmatpush.xpose.msra.mxu0 0.0
    %1044 = vmatpush.xpose.msra.mxu0 0.0
    %1045 = vmatpush.xpose.msra.mxu0 0.0
    %1046 = vmatpush.xpose.msra.mxu0 0.0
    %1047 = vmatpush.xpose.msra.mxu0 0.0
    %1048 = vmatpush.xpose.msra.mxu0 0.0
    %1049 = vmatpush.xpose.msra.mxu0 0.0
    %1050 = vmatpush.xpose.msra.mxu0 0.0
    %1051 = vmatpush.xpose.msra.mxu0 %v1034
    %1052 = vmatmul.f32.gmra.mxu0 %v1032
    %v1053 = vpop.f32.mrf.mxu0
    %v1054 = vadd.f32 0.0, %v1053
    %1055 = vdwg.mxu0
    %1057 = vrot.lane.b32.xlu0 %v1027, 96
    %v1058 = vpop.permute.xlu0 %1057
    %v1059 = vsel %vm215, %v1027, 0
    %v1061 = vsel %vm215, %v1058, 0
    %1063 = vmatpush.xpose.msra.mxu0 0.0
    %1064 = vmatpush.xpose.msra.mxu0 0.0
    %1065 = vmatpush.xpose.msra.mxu0 0.0
    %1066 = vmatpush.xpose.msra.mxu0 0.0
    %1067 = vmatpush.xpose.msra.mxu0 0.0
    %1068 = vmatpush.xpose.msra.mxu0 0.0
    %1069 = vmatpush.xpose.msra.mxu0 0.0
    %1070 = vmatpush.xpose.msra.mxu0 0.0
    %1071 = vmatpush.xpose.msra.mxu0 0.0
    %1072 = vmatpush.xpose.msra.mxu0 0.0
    %1073 = vmatpush.xpose.msra.mxu0 0.0
    %1074 = vmatpush.xpose.msra.mxu0 0.0
    %1075 = vmatpush.xpose.msra.mxu0 0.0
    %1076 = vmatpush.xpose.msra.mxu0 0.0
    %1077 = vmatpush.xpose.msra.mxu0 0.0
    %1078 = vmatpush.xpose.msra.mxu0 %v1061
    %1079 = vmatmul.f32.gmra.mxu0 %v1059
    %v1080 = vpop.f32.mrf.mxu0
    %v1081 = vadd.f32 0.0, %v1080
    %1082 = vdwg.mxu0
    %v1083 = vsel %vm215, %v1054, -inf
    %1084 = vmax.xlane.f32.xlu0 %v1083
    %v1085 = vpop.xlane.xlu0 %1084
    %v1086 = vsel %vm215, %v1081, -inf
    %1087 = vmax.xlane.f32.xlu0 %v1086
    %v1088 = vpop.xlane.xlu0 %1087
    %v1089 = vsub.f32 %v1054, %v1085
    %v1090 = vsub.f32 %v1081, %v1088
    %v1091 = vmul.f32 %v1089, 1.442695
    %v1092 = vpow.pop %v1091
    %v1093 = vmul.f32 %v1090, 1.442695
    %v1094 = vpow.pop %v1093
    %v1095 = vsel %vm215, %v1092, 0.0
    %1096 = vadd.xlane.f32.xlu0 %v1095
    %v1097 = vpop.xlane.xlu0 %1096
    %v1098 = vsel %vm215, %v1094, 0.0
    %1099 = vadd.xlane.f32.xlu0 %v1098
    %v1100 = vpop.xlane.xlu0 %1099
    %v1101 = vrcp.pop %v1097
    %v1102 = vrcp.pop %v1100
    %v1103 = vmul.f32 %v1092, %v1101
    %v1104 = vmul.f32 %v1094, %v1102
    %1105 = vrot.lane.b32.xlu0 %v1024, 64
    %v1106 = vpop.permute.xlu0 %1105
    %v1109 = vsel %vm215, %v1103, 0
    %1111 = vmatpush.msra.mxu0 0.0
    %1112 = vmatpush.msra.mxu0 0.0
    %1113 = vmatpush.msra.mxu0 0.0
    %1114 = vmatpush.msra.mxu0 0.0
    %1115 = vmatpush.msra.mxu0 0.0
    %1116 = vmatpush.msra.mxu0 0.0
    %1117 = vmatpush.msra.mxu0 0.0
    %1118 = vmatpush.msra.mxu0 0.0
    %1119 = vmatpush.msra.mxu0 0.0
    %1120 = vmatpush.msra.mxu0 0.0
    %1121 = vmatpush.msra.mxu0 0.0
    %1122 = vmatpush.msra.mxu0 0.0
    %1123 = vmatpush.msra.mxu0 0.0
    %1124 = vmatpush.msra.mxu0 0.0
    %1125 = vmatpush.msra.mxu0 0.0
    %1126 = vmatpush.msra.mxu0 %v1106
    %1127 = vmatmul.f32.gmra.mxu0 %v1109
    %v1128 = vpop.f32.mrf.mxu0
    %v1129 = vadd.f32 0.0, %v1128
    %1130 = vdwg.mxu0
    %1131 = vrot.lane.b32.xlu0 %v1027, 64
    %v1132 = vpop.permute.xlu0 %1131
    %v1135 = vsel %vm215, %v1104, 0
    %1137 = vmatpush.msra.mxu0 0.0
    %1138 = vmatpush.msra.mxu0 0.0
    %1139 = vmatpush.msra.mxu0 0.0
    %1140 = vmatpush.msra.mxu0 0.0
    %1141 = vmatpush.msra.mxu0 0.0
    %1142 = vmatpush.msra.mxu0 0.0
    %1143 = vmatpush.msra.mxu0 0.0
    %1144 = vmatpush.msra.mxu0 0.0
    %1145 = vmatpush.msra.mxu0 0.0
    %1146 = vmatpush.msra.mxu0 0.0
    %1147 = vmatpush.msra.mxu0 0.0
    %1148 = vmatpush.msra.mxu0 0.0
    %1149 = vmatpush.msra.mxu0 0.0
    %1150 = vmatpush.msra.mxu0 0.0
    %1151 = vmatpush.msra.mxu0 0.0
    %1152 = vmatpush.msra.mxu0 %v1132
    %1153 = vmatmul.f32.gmra.mxu0 %v1135
    %v1154 = vpop.f32.mrf.mxu0
    %v1155 = vadd.f32 0.0, %v1154
    %1156 = vdwg.mxu0
    %1157 = vrot.lane.b32.xlu0 %v1024, 120
    %v1158 = vpop.permute.xlu0 %1157
    %1159 = vrot.lane.b32.xlu0 %v1024, 88
    %v1160 = vpop.permute.xlu0 %1159
    %v1161 = vsel %vm215, %v1158, 0
    %v1163 = vsel %vm215, %v1160, 0
    %1165 = vmatpush.xpose.msra.mxu0 0.0
    %1166 = vmatpush.xpose.msra.mxu0 0.0
    %1167 = vmatpush.xpose.msra.mxu0 0.0
    %1168 = vmatpush.xpose.msra.mxu0 0.0
    %1169 = vmatpush.xpose.msra.mxu0 0.0
    %1170 = vmatpush.xpose.msra.mxu0 0.0
    %1171 = vmatpush.xpose.msra.mxu0 0.0
    %1172 = vmatpush.xpose.msra.mxu0 0.0
    %1173 = vmatpush.xpose.msra.mxu0 0.0
    %1174 = vmatpush.xpose.msra.mxu0 0.0
    %1175 = vmatpush.xpose.msra.mxu0 0.0
    %1176 = vmatpush.xpose.msra.mxu0 0.0
    %1177 = vmatpush.xpose.msra.mxu0 0.0
    %1178 = vmatpush.xpose.msra.mxu0 0.0
    %1179 = vmatpush.xpose.msra.mxu0 0.0
    %1180 = vmatpush.xpose.msra.mxu0 %v1163
    %1181 = vmatmul.f32.gmra.mxu0 %v1161
    %v1182 = vpop.f32.mrf.mxu0
    %v1183 = vadd.f32 0.0, %v1182
    %1184 = vdwg.mxu0
    %1185 = vrot.lane.b32.xlu0 %v1027, 120
    %v1186 = vpop.permute.xlu0 %1185
    %1187 = vrot.lane.b32.xlu0 %v1027, 88
    %v1188 = vpop.permute.xlu0 %1187
    %v1189 = vsel %vm215, %v1186, 0
    %v1191 = vsel %vm215, %v1188, 0
    %1193 = vmatpush.xpose.msra.mxu0 0.0
    %1194 = vmatpush.xpose.msra.mxu0 0.0
    %1195 = vmatpush.xpose.msra.mxu0 0.0
    %1196 = vmatpush.xpose.msra.mxu0 0.0
    %1197 = vmatpush.xpose.msra.mxu0 0.0
    %1198 = vmatpush.xpose.msra.mxu0 0.0
    %1199 = vmatpush.xpose.msra.mxu0 0.0
    %1200 = vmatpush.xpose.msra.mxu0 0.0
    %1201 = vmatpush.xpose.msra.mxu0 0.0
    %1202 = vmatpush.xpose.msra.mxu0 0.0
    %1203 = vmatpush.xpose.msra.mxu0 0.0
    %1204 = vmatpush.xpose.msra.mxu0 0.0
    %1205 = vmatpush.xpose.msra.mxu0 0.0
    %1206 = vmatpush.xpose.msra.mxu0 0.0
    %1207 = vmatpush.xpose.msra.mxu0 0.0
    %1208 = vmatpush.xpose.msra.mxu0 %v1191
    %1209 = vmatmul.f32.gmra.mxu0 %v1189
    %v1210 = vpop.f32.mrf.mxu0
    %v1211 = vadd.f32 0.0, %v1210
    %1212 = vdwg.mxu0
    %v1213 = vsel %vm215, %v1183, -inf
    %1214 = vmax.xlane.f32.xlu0 %v1213
    %v1215 = vpop.xlane.xlu0 %1214
    %v1216 = vsel %vm215, %v1211, -inf
    %1217 = vmax.xlane.f32.xlu0 %v1216
    %v1218 = vpop.xlane.xlu0 %1217
    %v1219 = vsub.f32 %v1183, %v1215
    %v1220 = vsub.f32 %v1211, %v1218
    %v1221 = vmul.f32 %v1219, 1.442695
    %v1222 = vpow.pop %v1221
    %v1223 = vmul.f32 %v1220, 1.442695
    %v1224 = vpow.pop %v1223
    %v1225 = vsel %vm215, %v1222, 0.0
    %1226 = vadd.xlane.f32.xlu0 %v1225
    %v1227 = vpop.xlane.xlu0 %1226
    %v1228 = vsel %vm215, %v1224, 0.0
    %1229 = vadd.xlane.f32.xlu0 %v1228
    %v1230 = vpop.xlane.xlu0 %1229
    %v1231 = vrcp.pop %v1227
    %v1232 = vrcp.pop %v1230
    %v1233 = vmul.f32 %v1222, %v1231
    %v1234 = vmul.f32 %v1224, %v1232
    %1235 = vrot.lane.b32.xlu0 %v1024, 56
    %v1236 = vpop.permute.xlu0 %1235
    %v1239 = vsel %vm215, %v1233, 0
    %1241 = vmatpush.msra.mxu0 0.0
    %1242 = vmatpush.msra.mxu0 0.0
    %1243 = vmatpush.msra.mxu0 0.0
    %1244 = vmatpush.msra.mxu0 0.0
    %1245 = vmatpush.msra.mxu0 0.0
    %1246 = vmatpush.msra.mxu0 0.0
    %1247 = vmatpush.msra.mxu0 0.0
    %1248 = vmatpush.msra.mxu0 0.0
    %1249 = vmatpush.msra.mxu0 0.0
    %1250 = vmatpush.msra.mxu0 0.0
    %1251 = vmatpush.msra.mxu0 0.0
    %1252 = vmatpush.msra.mxu0 0.0
    %1253 = vmatpush.msra.mxu0 0.0
    %1254 = vmatpush.msra.mxu0 0.0
    %1255 = vmatpush.msra.mxu0 0.0
    %1256 = vmatpush.msra.mxu0 %v1236
    %1257 = vmatmul.f32.gmra.mxu0 %v1239
    %v1258 = vpop.f32.mrf.mxu0
    %v1259 = vadd.f32 0.0, %v1258
    %1260 = vdwg.mxu0
    %1261 = vrot.lane.b32.xlu0 %v1027, 56
    %v1262 = vpop.permute.xlu0 %1261
    %v1265 = vsel %vm215, %v1234, 0
    %1267 = vmatpush.msra.mxu0 0.0
    %1268 = vmatpush.msra.mxu0 0.0
    %1269 = vmatpush.msra.mxu0 0.0
    %1270 = vmatpush.msra.mxu0 0.0
    %1271 = vmatpush.msra.mxu0 0.0
    %1272 = vmatpush.msra.mxu0 0.0
    %1273 = vmatpush.msra.mxu0 0.0
    %1274 = vmatpush.msra.mxu0 0.0
    %1275 = vmatpush.msra.mxu0 0.0
    %1276 = vmatpush.msra.mxu0 0.0
    %1277 = vmatpush.msra.mxu0 0.0
    %1278 = vmatpush.msra.mxu0 0.0
    %1279 = vmatpush.msra.mxu0 0.0
    %1280 = vmatpush.msra.mxu0 0.0
    %1281 = vmatpush.msra.mxu0 0.0
    %1282 = vmatpush.msra.mxu0 %v1262
    %1283 = vmatmul.f32.gmra.mxu0 %v1265
    %v1284 = vpop.f32.mrf.mxu0
    %v1285 = vadd.f32 0.0, %v1284
    %1286 = vdwg.mxu0
    %1287 = vrot.lane.b32.xlu0 %v1024, 112
    %v1288 = vpop.permute.xlu0 %1287
    %1289 = vrot.lane.b32.xlu0 %v1024, 80
    %v1290 = vpop.permute.xlu0 %1289
    %v1291 = vsel %vm215, %v1288, 0
    %v1293 = vsel %vm215, %v1290, 0
    %1295 = vmatpush.xpose.msra.mxu0 0.0
    %1296 = vmatpush.xpose.msra.mxu0 0.0
    %1297 = vmatpush.xpose.msra.mxu0 0.0
    %1298 = vmatpush.xpose.msra.mxu0 0.0
    %1299 = vmatpush.xpose.msra.mxu0 0.0
    %1300 = vmatpush.xpose.msra.mxu0 0.0
    %1301 = vmatpush.xpose.msra.mxu0 0.0
    %1302 = vmatpush.xpose.msra.mxu0 0.0
    %1303 = vmatpush.xpose.msra.mxu0 0.0
    %1304 = vmatpush.xpose.msra.mxu0 0.0
    %1305 = vmatpush.xpose.msra.mxu0 0.0
    %1306 = vmatpush.xpose.msra.mxu0 0.0
    %1307 = vmatpush.xpose.msra.mxu0 0.0
    %1308 = vmatpush.xpose.msra.mxu0 0.0
    %1309 = vmatpush.xpose.msra.mxu0 0.0
    %1310 = vmatpush.xpose.msra.mxu0 %v1293
    %1311 = vmatmul.f32.gmra.mxu0 %v1291
    %v1312 = vpop.f32.mrf.mxu0
    %v1313 = vadd.f32 0.0, %v1312
    %1314 = vdwg.mxu0
    %1315 = vrot.lane.b32.xlu0 %v1027, 112
    %v1316 = vpop.permute.xlu0 %1315
    %1317 = vrot.lane.b32.xlu0 %v1027, 80
    %v1318 = vpop.permute.xlu0 %1317
    %v1319 = vsel %vm215, %v1316, 0
    %v1321 = vsel %vm215, %v1318, 0
    %1323 = vmatpush.xpose.msra.mxu0 0.0
    %1324 = vmatpush.xpose.msra.mxu0 0.0
    %1325 = vmatpush.xpose.msra.mxu0 0.0
    %1326 = vmatpush.xpose.msra.mxu0 0.0
    %1327 = vmatpush.xpose.msra.mxu0 0.0
    %1328 = vmatpush.xpose.msra.mxu0 0.0
    %1329 = vmatpush.xpose.msra.mxu0 0.0
    %1330 = vmatpush.xpose.msra.mxu0 0.0
    %1331 = vmatpush.xpose.msra.mxu0 0.0
    %1332 = vmatpush.xpose.msra.mxu0 0.0
    %1333 = vmatpush.xpose.msra.mxu0 0.0
    %1334 = vmatpush.xpose.msra.mxu0 0.0
    %1335 = vmatpush.xpose.msra.mxu0 0.0
    %1336 = vmatpush.xpose.msra.mxu0 0.0
    %1337 = vmatpush.xpose.msra.mxu0 0.0
    %1338 = vmatpush.xpose.msra.mxu0 %v1321
    %1339 = vmatmul.f32.gmra.mxu0 %v1319
    %v1340 = vpop.f32.mrf.mxu0
    %v1341 = vadd.f32 0.0, %v1340
    %1342 = vdwg.mxu0
    %v1343 = vsel %vm215, %v1313, -inf
    %1344 = vmax.xlane.f32.xlu0 %v1343
    %v1345 = vpop.xlane.xlu0 %1344
    %v1346 = vsel %vm215, %v1341, -inf
    %1347 = vmax.xlane.f32.xlu0 %v1346
    %v1348 = vpop.xlane.xlu0 %1347
    %v1349 = vsub.f32 %v1313, %v1345
    %v1350 = vsub.f32 %v1341, %v1348
    %v1351 = vmul.f32 %v1349, 1.442695
    %v1352 = vpow.pop %v1351
    %v1353 = vmul.f32 %v1350, 1.442695
    %v1354 = vpow.pop %v1353
    %v1355 = vsel %vm215, %v1352, 0.0
    %1356 = vadd.xlane.f32.xlu0 %v1355
    %v1357 = vpop.xlane.xlu0 %1356
    %v1358 = vsel %vm215, %v1354, 0.0
    %1359 = vadd.xlane.f32.xlu0 %v1358
    %v1360 = vpop.xlane.xlu0 %1359
    %v1361 = vrcp.pop %v1357
    %v1362 = vrcp.pop %v1360
    %v1363 = vmul.f32 %v1352, %v1361
    %v1364 = vmul.f32 %v1354, %v1362
    %1365 = vrot.lane.b32.xlu0 %v1024, 48
    %v1366 = vpop.permute.xlu0 %1365
    %v1369 = vsel %vm215, %v1363, 0
    %1371 = vmatpush.msra.mxu0 0.0
    %1372 = vmatpush.msra.mxu0 0.0
    %1373 = vmatpush.msra.mxu0 0.0
    %1374 = vmatpush.msra.mxu0 0.0
    %1375 = vmatpush.msra.mxu0 0.0
    %1376 = vmatpush.msra.mxu0 0.0
    %1377 = vmatpush.msra.mxu0 0.0
    %1378 = vmatpush.msra.mxu0 0.0
    %1379 = vmatpush.msra.mxu0 0.0
    %1380 = vmatpush.msra.mxu0 0.0
    %1381 = vmatpush.msra.mxu0 0.0
    %1382 = vmatpush.msra.mxu0 0.0
    %1383 = vmatpush.msra.mxu0 0.0
    %1384 = vmatpush.msra.mxu0 0.0
    %1385 = vmatpush.msra.mxu0 0.0
    %1386 = vmatpush.msra.mxu0 %v1366
    %1387 = vmatmul.f32.gmra.mxu0 %v1369
    %v1388 = vpop.f32.mrf.mxu0
    %v1389 = vadd.f32 0.0, %v1388
    %1390 = vdwg.mxu0
    %1391 = vrot.lane.b32.xlu0 %v1027, 48
    %v1392 = vpop.permute.xlu0 %1391
    %v1395 = vsel %vm215, %v1364, 0
    %1397 = vmatpush.msra.mxu0 0.0
    %1398 = vmatpush.msra.mxu0 0.0
    %1399 = vmatpush.msra.mxu0 0.0
    %1400 = vmatpush.msra.mxu0 0.0
    %1401 = vmatpush.msra.mxu0 0.0
    %1402 = vmatpush.msra.mxu0 0.0
    %1403 = vmatpush.msra.mxu0 0.0
    %1404 = vmatpush.msra.mxu0 0.0
    %1405 = vmatpush.msra.mxu0 0.0
    %1406 = vmatpush.msra.mxu0 0.0
    %1407 = vmatpush.msra.mxu0 0.0
    %1408 = vmatpush.msra.mxu0 0.0
    %1409 = vmatpush.msra.mxu0 0.0
    %1410 = vmatpush.msra.mxu0 0.0
    %1411 = vmatpush.msra.mxu0 0.0
    %1412 = vmatpush.msra.mxu0 %v1392
    %1413 = vmatmul.f32.gmra.mxu0 %v1395
    %v1414 = vpop.f32.mrf.mxu0
    %v1415 = vadd.f32 0.0, %v1414
    %1416 = vdwg.mxu0
    %1417 = vrot.lane.b32.xlu0 %v1024, 104
    %v1418 = vpop.permute.xlu0 %1417
    %1419 = vrot.lane.b32.xlu0 %v1024, 72
    %v1420 = vpop.permute.xlu0 %1419
    %v1421 = vsel %vm215, %v1418, 0
    %v1423 = vsel %vm215, %v1420, 0
    %1425 = vmatpush.xpose.msra.mxu0 0.0
    %1426 = vmatpush.xpose.msra.mxu0 0.0
    %1427 = vmatpush.xpose.msra.mxu0 0.0
    %1428 = vmatpush.xpose.msra.mxu0 0.0
    %1429 = vmatpush.xpose.msra.mxu0 0.0
    %1430 = vmatpush.xpose.msra.mxu0 0.0
    %1431 = vmatpush.xpose.msra.mxu0 0.0
    %1432 = vmatpush.xpose.msra.mxu0 0.0
    %1433 = vmatpush.xpose.msra.mxu0 0.0
    %1434 = vmatpush.xpose.msra.mxu0 0.0
    %1435 = vmatpush.xpose.msra.mxu0 0.0
    %1436 = vmatpush.xpose.msra.mxu0 0.0
    %1437 = vmatpush.xpose.msra.mxu0 0.0
    %1438 = vmatpush.xpose.msra.mxu0 0.0
    %1439 = vmatpush.xpose.msra.mxu0 0.0
    %1440 = vmatpush.xpose.msra.mxu0 %v1423
    %1441 = vmatmul.f32.gmra.mxu0 %v1421
    %v1442 = vpop.f32.mrf.mxu0
    %v1443 = vadd.f32 0.0, %v1442
    %1444 = vdwg.mxu0
    %1445 = vrot.lane.b32.xlu0 %v1027, 104
    %v1446 = vpop.permute.xlu0 %1445
    %1447 = vrot.lane.b32.xlu0 %v1027, 72
    %v1448 = vpop.permute.xlu0 %1447
    %v1449 = vsel %vm215, %v1446, 0
    %v1451 = vsel %vm215, %v1448, 0
    %1453 = vmatpush.xpose.msra.mxu0 0.0
    %1454 = vmatpush.xpose.msra.mxu0 0.0
    %1455 = vmatpush.xpose.msra.mxu0 0.0
    %1456 = vmatpush.xpose.msra.mxu0 0.0
    %1457 = vmatpush.xpose.msra.mxu0 0.0
    %1458 = vmatpush.xpose.msra.mxu0 0.0
    %1459 = vmatpush.xpose.msra.mxu0 0.0
    %1460 = vmatpush.xpose.msra.mxu0 0.0
    %1461 = vmatpush.xpose.msra.mxu0 0.0
    %1462 = vmatpush.xpose.msra.mxu0 0.0
    %1463 = vmatpush.xpose.msra.mxu0 0.0
    %1464 = vmatpush.xpose.msra.mxu0 0.0
    %1465 = vmatpush.xpose.msra.mxu0 0.0
    %1466 = vmatpush.xpose.msra.mxu0 0.0
    %1467 = vmatpush.xpose.msra.mxu0 0.0
    %1468 = vmatpush.xpose.msra.mxu0 %v1451
    %1469 = vmatmul.f32.gmra.mxu0 %v1449
    %v1470 = vpop.f32.mrf.mxu0
    %v1471 = vadd.f32 0.0, %v1470
    %1472 = vdwg.mxu0
    %v1473 = vsel %vm215, %v1443, -inf
    %1474 = vmax.xlane.f32.xlu0 %v1473
    %v1475 = vpop.xlane.xlu0 %1474
    %v1476 = vsel %vm215, %v1471, -inf
    %1477 = vmax.xlane.f32.xlu0 %v1476
    %v1478 = vpop.xlane.xlu0 %1477
    %v1479 = vsub.f32 %v1443, %v1475
    %v1480 = vsub.f32 %v1471, %v1478
    %v1481 = vmul.f32 %v1479, 1.442695
    %v1482 = vpow.pop %v1481
    %v1483 = vmul.f32 %v1480, 1.442695
    %v1484 = vpow.pop %v1483
    %v1485 = vsel %vm215, %v1482, 0.0
    %1486 = vadd.xlane.f32.xlu0 %v1485
    %v1487 = vpop.xlane.xlu0 %1486
    %v1488 = vsel %vm215, %v1484, 0.0
    %1489 = vadd.xlane.f32.xlu0 %v1488
    %v1490 = vpop.xlane.xlu0 %1489
    %v1491 = vrcp.pop %v1487
    %v1492 = vrcp.pop %v1490
    %v1493 = vmul.f32 %v1482, %v1491
    %v1494 = vmul.f32 %v1484, %v1492
    %1495 = vrot.lane.b32.xlu0 %v1024, 40
    %v1496 = vpop.permute.xlu0 %1495
    %v1499 = vsel %vm215, %v1493, 0
    %1501 = vmatpush.msra.mxu0 0.0
    %1502 = vmatpush.msra.mxu0 0.0
    %1503 = vmatpush.msra.mxu0 0.0
    %1504 = vmatpush.msra.mxu0 0.0
    %1505 = vmatpush.msra.mxu0 0.0
    %1506 = vmatpush.msra.mxu0 0.0
    %1507 = vmatpush.msra.mxu0 0.0
    %1508 = vmatpush.msra.mxu0 0.0
    %1509 = vmatpush.msra.mxu0 0.0
    %1510 = vmatpush.msra.mxu0 0.0
    %1511 = vmatpush.msra.mxu0 0.0
    %1512 = vmatpush.msra.mxu0 0.0
    %1513 = vmatpush.msra.mxu0 0.0
    %1514 = vmatpush.msra.mxu0 0.0
    %1515 = vmatpush.msra.mxu0 0.0
    %1516 = vmatpush.msra.mxu0 %v1496
    %1517 = vmatmul.f32.gmra.mxu0 %v1499
    %v1518 = vpop.f32.mrf.mxu0
    %v1519 = vadd.f32 0.0, %v1518
    %1520 = vdwg.mxu0
    %1521 = vrot.lane.b32.xlu0 %v1027, 40
    %v1522 = vpop.permute.xlu0 %1521
    %v1525 = vsel %vm215, %v1494, 0
    %1527 = vmatpush.msra.mxu0 0.0
    %1528 = vmatpush.msra.mxu0 0.0
    %1529 = vmatpush.msra.mxu0 0.0
    %1530 = vmatpush.msra.mxu0 0.0
    %1531 = vmatpush.msra.mxu0 0.0
    %1532 = vmatpush.msra.mxu0 0.0
    %1533 = vmatpush.msra.mxu0 0.0
    %1534 = vmatpush.msra.mxu0 0.0
    %1535 = vmatpush.msra.mxu0 0.0
    %1536 = vmatpush.msra.mxu0 0.0
    %1537 = vmatpush.msra.mxu0 0.0
    %1538 = vmatpush.msra.mxu0 0.0
    %1539 = vmatpush.msra.mxu0 0.0
    %1540 = vmatpush.msra.mxu0 0.0
    %1541 = vmatpush.msra.mxu0 0.0
    %1542 = vmatpush.msra.mxu0 %v1522
    %1543 = vmatmul.f32.gmra.mxu0 %v1525
    %v1544 = vpop.f32.mrf.mxu0
    %v1545 = vadd.f32 0.0, %v1544
    %1546 = vdwg.mxu0
    %1549 = vrot.lane.b32.xlu0 %v1259, 8
    %v1550 = vpop.permute.xlu0 %1549
    %1551 = vrot.lane.b32.xlu0 %v1285, 8
    %v1552 = vpop.permute.xlu0 %1551
    %1557 = vrot.lane.b32.xlu0 %v1389, 16
    %v1558 = vpop.permute.xlu0 %1557
    %1559 = vrot.lane.b32.xlu0 %v1415, 16
    %v1560 = vpop.permute.xlu0 %1559
    %1565 = vrot.lane.b32.xlu0 %v1519, 24
    %v1566 = vpop.permute.xlu0 %1565
    %1567 = vrot.lane.b32.xlu0 %v1545, 24
    %v1568 = vpop.permute.xlu0 %1567
    %v1571 = vsel %vm215, %v1129, %v1550
    %v1572 = vsel %vm215, %v1155, %v1552
    %v1573 = vsel %vm757, %v1571, %v1558
    %v1574 = vsel %vm757, %v1572, %v1560
    %v1575 = vsel %vm760, %v1573, %v1566
    %v1576 = vsel %vm760, %v1574, %v1568
    %v1577 = vperm.slane %v71, 3
    %1582 = vrot.lane.b32.xlu0 %v986, 32
    %v1583 = vpop.permute.xlu0 %1582
    %1584 = vrot.lane.b32.xlu0 %v987, 32
    %v1585 = vpop.permute.xlu0 %1584
    %1586 = vrot.lane.b32.xlu0 %v988, 32
    %v1587 = vpop.permute.xlu0 %1586
    %1588 = vrot.lane.b32.xlu0 %v989, 32
    %v1589 = vpop.permute.xlu0 %1588
    %v1595 = vsel %vm112, %v1575, 0
    %v1598 = vsel %vm112, %v1576, 0
    %1600 = vmatpush.msra.mxu0 0.0
    %1601 = vmatpush.msra.mxu0 0.0
    %1602 = vmatpush.msra.mxu0 0.0
    %1603 = vmatpush.msra.mxu0 0.0
    %1604 = vmatpush.msra.mxu0 0.0
    %1605 = vmatpush.msra.mxu0 0.0
    %1606 = vmatpush.msra.mxu0 0.0
    %1607 = vmatpush.msra.mxu0 0.0
    %1608 = vmatpush.msra.mxu0 0.0
    %1609 = vmatpush.msra.mxu0 0.0
    %1610 = vmatpush.msra.mxu0 0.0
    %1611 = vmatpush.msra.mxu0 0.0
    %1612 = vmatpush.msra.mxu0 %v1589
    %1613 = vmatpush.msra.mxu0 %v1587
    %1614 = vmatpush.msra.mxu0 %v1585
    %1615 = vmatpush.msra.mxu0 %v1583
    %1616 = vmatmul.f32.gmra.mxu0 %v1595
    %v1617 = vpop.f32.mrf.mxu0
    %v1618 = vadd.f32 %v1577, %v1617
    %1619 = vmatmul.f32.gmra.mxu0 %v1598
    %v1620 = vpop.f32.mrf.mxu0
    %v1621 = vadd.f32 %v1577, %v1620
    %1622 = vdwg.mxu0
    %v1623 = vadd.f32 %v983, %v1618
    %v1624 = vadd.f32 %v984, %v1621
    %v1625 = vsel %vm112, %v1623, 0.0
    %1626 = vadd.xlane.f32.xlu0 %v1625
    %v1627 = vpop.xlane.xlu0 %1626
    %v1628 = vsel %vm112, %v1624, 0.0
    %1629 = vadd.xlane.f32.xlu0 %v1628
    %v1630 = vpop.xlane.xlu0 %1629
    %v1631 = vmul.f32 %v1627, %v125
    %v1632 = vmul.f32 %v1630, %v125
    %v1633 = vsub.f32 %v1623, %v1631
    %v1634 = vsub.f32 %v1624, %v1632
    %v1635 = vmul.f32 %v1633, %v1633
    %v1636 = vmul.f32 %v1634, %v1634
    %v1637 = vsel %vm112, %v1635, 0.0
    %1638 = vadd.xlane.f32.xlu0 %v1637
    %v1639 = vpop.xlane.xlu0 %1638
    %v1640 = vsel %vm112, %v1636, 0.0
    %1641 = vadd.xlane.f32.xlu0 %v1640
    %v1642 = vpop.xlane.xlu0 %1641
    %v1643 = vmul.f32 %v1639, %v125
    %v1644 = vmul.f32 %v1642, %v125
    %v1645 = vadd.f32 %v1643, 1e-05
    %v1646 = vadd.f32 %v1644, 1e-05
    %v1647 = vrsqrt.pop %v1645
    %v1648 = vmul.f32 %v1647, %v1645
    %v1649 = vmul.f32 %v1648, %v1647
    %v1650 = vmul.f32 0.5, %v1649
    %v1651 = vsub.f32 1.5, %v1650
    %v1652 = vmul.f32 %v1647, %v1651
    %vm1653 = vweird.f32 %v1645
    %vm1654 = vweird.f32 %v1647
    %vm1655 = vmor %vm1653, %vm1654
    %v1656 = vsel %vm1655, %v1647, %v1652
    %v1657 = vrsqrt.pop %v1646
    %v1658 = vmul.f32 %v1657, %v1646
    %v1659 = vmul.f32 %v1658, %v1657
    %v1660 = vmul.f32 0.5, %v1659
    %v1661 = vsub.f32 1.5, %v1660
    %v1662 = vmul.f32 %v1657, %v1661
    %vm1663 = vweird.f32 %v1646
    %vm1664 = vweird.f32 %v1657
    %vm1665 = vmor %vm1663, %vm1664
    %v1666 = vsel %vm1665, %v1657, %v1662
    %v1667 = vmul.f32 %v1633, %v1656
    %v1668 = vmul.f32 %v1634, %v1666
    %v1669 = vperm.slane %v71, 4
    %v1670 = vmul.f32 %v1667, %v1669
    %v1671 = vmul.f32 %v1668, %v1669
    %v1672 = vperm.slane %v71, 5
    %v1673 = vadd.f32 %v1670, %v1672
    %v1674 = vadd.f32 %v1671, %v1672
    %v1675 = vperm.slane %v71, 6
    %v1677 = vsel %vm112, %v1673, 0
    %v1680 = vsel %vm112, %v1674, 0
    %1682 = vmatpush.msra.mxu0 0.0
    %1683 = vmatpush.msra.mxu0 0.0
    %1684 = vmatpush.msra.mxu0 0.0
    %1685 = vmatpush.msra.mxu0 0.0
    %1686 = vmatpush.msra.mxu0 0.0
    %1687 = vmatpush.msra.mxu0 0.0
    %1688 = vmatpush.msra.mxu0 0.0
    %1689 = vmatpush.msra.mxu0 0.0
    %1690 = vmatpush.msra.mxu0 0.0
    %1691 = vmatpush.msra.mxu0 0.0
    %1692 = vmatpush.msra.mxu0 0.0
    %1693 = vmatpush.msra.mxu0 0.0
    %1694 = vmatpush.msra.mxu0 %v994
    %1695 = vmatpush.msra.mxu0 %v993
    %1696 = vmatpush.msra.mxu0 %v992
    %1697 = vmatpush.msra.mxu0 %v991
    %1698 = vmatmul.f32.gmra.mxu0 %v1677
    %v1699 = vpop.f32.mrf.mxu0
    %v1700 = vadd.f32 %v1675, %v1699
    %1701 = vmatmul.f32.gmra.mxu0 %v1680
    %v1702 = vpop.f32.mrf.mxu0
    %v1703 = vadd.f32 %v1675, %v1702
    %1704 = vdwg.mxu0
    %v1705 = vmul.f32 %v1700, %v1700
    %v1706 = vmul.f32 %v1703, %v1703
    %v1707 = vmul.f32 %v1700, %v1705
    %v1708 = vmul.f32 %v1703, %v1706
    %v1709 = vmul.f32 %v1707, 0.044715
    %v1710 = vmul.f32 %v1708, 0.044715
    %v1711 = vadd.f32 %v1700, %v1709
    %v1712 = vadd.f32 %v1703, %v1710
    %v1713 = vmul.f32 %v1711, 0.7978846
    %v1714 = vmul.f32 %v1712, 0.7978846
    %v1715 = vtanh.pop %v1713
    %v1716 = vtanh.pop %v1714
    %v1717 = vadd.f32 %v1715, 1.0
    %v1718 = vadd.f32 %v1716, 1.0
    %v1719 = vmul.f32 %v1717, 0.5
    %v1720 = vmul.f32 %v1718, 0.5
    %v1721 = vmul.f32 %v1700, %v1719
    %v1722 = vmul.f32 %v1703, %v1720
    %v1723 = vperm.slane %v71, 7
    %1724 = vmatpush.xpose.msra.mxu0 0.0
    %1725 = vmatpush.xpose.msra.mxu0 0.0
    %1726 = vmatpush.xpose.msra.mxu0 0.0
    %1727 = vmatpush.xpose.msra.mxu0 0.0
    %1728 = vmatpush.xpose.msra.mxu0 0.0
    %1729 = vmatpush.xpose.msra.mxu0 0.0
    %1730 = vmatpush.xpose.msra.mxu0 0.0
    %1731 = vmatpush.xpose.msra.mxu0 0.0
    %1732 = vmatpush.xpose.msra.mxu0 0.0
    %1733 = vmatpush.xpose.msra.mxu0 0.0
    %1734 = vmatpush.xpose.msra.mxu0 0.0
    %1735 = vmatpush.xpose.msra.mxu0 0.0
    %1736 = vmatpush.xpose.msra.mxu0 %v998
    %1737 = vmatpush.xpose.msra.mxu0 %v997
    %1738 = vmatpush.xpose.msra.mxu0 %v996
    %1739 = vmatpush.xpose.msra.mxu0 %v995
    %1740 = vmatmul.f32.gmra.mxu0 %v1721
    %v1741 = vpop.f32.mrf.mxu0
    %v1742 = vadd.f32 %v1723, %v1741
    %1743 = vmatmul.f32.gmra.mxu0 %v1722
    %v1744 = vpop.f32.mrf.mxu0
    %v1745 = vadd.f32 %v1723, %v1744
    %1746 = vdwg.mxu0
    %v1747 = vadd.f32 %v1673, %v1742
    %v1748 = vadd.f32 %v1674, %v1745
    %v1749 = vsel %vm112, %v1747, 0.0
    %1750 = vadd.xlane.f32.xlu0 %v1749
    %v1751 = vpop.xlane.xlu0 %1750
    %v1752 = vsel %vm112, %v1748, 0.0
    %1753 = vadd.xlane.f32.xlu0 %v1752
    %v1754 = vpop.xlane.xlu0 %1753
    %v1755 = vmul.f32 %v1751, %v125
    %v1756 = vmul.f32 %v1754, %v125
    %v1757 = vsub.f32 %v1747, %v1755
    %v1758 = vsub.f32 %v1748, %v1756
    %v1759 = vmul.f32 %v1757, %v1757
    %v1760 = vmul.f32 %v1758, %v1758
    %v1761 = vsel %vm112, %v1759, 0.0
    %1762 = vadd.xlane.f32.xlu0 %v1761
    %v1763 = vpop.xlane.xlu0 %1762
    %v1764 = vsel %vm112, %v1760, 0.0
    %1765 = vadd.xlane.f32.xlu0 %v1764
    %v1766 = vpop.xlane.xlu0 %1765
    %v1767 = vmul.f32 %v1763, %v125
    %v1768 = vmul.f32 %v1766, %v125
    %v1769 = vadd.f32 %v1767, 1e-05
    %v1770 = vadd.f32 %v1768, 1e-05
    %v1771 = vrsqrt.pop %v1769
    %v1772 = vmul.f32 %v1771, %v1769
    %v1773 = vmul.f32 %v1772, %v1771
    %v1774 = vmul.f32 0.5, %v1773
    %v1775 = vsub.f32 1.5, %v1774
    %v1776 = vmul.f32 %v1771, %v1775
    %vm1777 = vweird.f32 %v1769
    %vm1778 = vweird.f32 %v1771
    %vm1779 = vmor %vm1777, %vm1778
    %v1780 = vsel %vm1779, %v1771, %v1776
    %v1781 = vrsqrt.pop %v1770
    %v1782 = vmul.f32 %v1781, %v1770
    %v1783 = vmul.f32 %v1782, %v1781
    %v1784 = vmul.f32 0.5, %v1783
    %v1785 = vsub.f32 1.5, %v1784
    %v1786 = vmul.f32 %v1781, %v1785
    %vm1787 = vweird.f32 %v1770
    %vm1788 = vweird.f32 %v1781
    %vm1789 = vmor %vm1787, %vm1788
    %v1790 = vsel %vm1789, %v1781, %v1786
    %v1791 = vmul.f32 %v1757, %v1780
    %v1792 = vmul.f32 %v1758, %v1790
    %v1793 = vperm.slane %v72, 0
    %v1794 = vmul.f32 %v1791, %v1793
    %v1795 = vmul.f32 %v1792, %v1793
    %v1796 = vperm.slane %v72, 1
    %v1797 = vadd.f32 %v1794, %v1796
    %v1798 = vadd.f32 %v1795, %v1796
    %v1799 = vperm.slane %v72, 4
    %v1802 = vrot.slane %v1798, 7
    %vm1803 = vcmask 1041409
    %v1804 = vsel %vm1803, %v1802, %v1797
    %v1806 = vrot.slane %v72, 2
    %v1807 = vsel %vm112, %v1804, 0
    %v1809 = vsel %vm112, %v1806, 0
    %1811 = vmatpush.xpose.msra.mxu0 0.0
    %1812 = vmatpush.xpose.msra.mxu0 0.0
    %1813 = vmatpush.xpose.msra.mxu0 0.0
    %1814 = vmatpush.xpose.msra.mxu0 0.0
    %1815 = vmatpush.xpose.msra.mxu0 0.0
    %1816 = vmatpush.xpose.msra.mxu0 0.0
    %1817 = vmatpush.xpose.msra.mxu0 0.0
    %1818 = vmatpush.xpose.msra.mxu0 0.0
    %1819 = vmatpush.xpose.msra.mxu0 0.0
    %1820 = vmatpush.xpose.msra.mxu0 0.0
    %1821 = vmatpush.xpose.msra.mxu0 0.0
    %1822 = vmatpush.xpose.msra.mxu0 0.0
    %1823 = vmatpush.xpose.msra.mxu0 0.0
    %1824 = vmatpush.xpose.msra.mxu0 0.0
    %1825 = vmatpush.xpose.msra.mxu0 0.0
    %1826 = vmatpush.xpose.msra.mxu0 %v1809
    %1827 = vmatmul.f32.gmra.mxu0 %v1807
    %v1828 = vpop.f32.mrf.mxu0
    %v1829 = vadd.f32 %v1799, %v1828
    %1830 = vdwg.mxu0
    %vm1831 = vcmask 9216
    %1832 = vst.msk [vmem:[#allocation8] sm:$0x3] %vm1831, %v1829
    // Predicated region
    $region30: #{roberta_forward.1} parent=1 // pred_check
      _
    $region31: #{roberta_forward.1} parent=1 // pred_check_branch
      %1834 = sbr.rel (0) target = $region33
    $region32: #{roberta_forward.1} parent=1 // pred_region
      %1836 = vsyncadd [#allocation4], 0
      %s1838 = sshll.u32 [#allocation8], 4
      %s1839 = int_to_ptr.vmem [resolvable:$true] %s1838
      %s1840 = sshll.u32 %s4, 4
      %s1841 = int_to_ptr.hbm [resolvable:$true] %s1840
      %1843 = dma.vmem_to_hbm [thread:$0]  %s1839, 32, %s1841, [#allocation4]
    $region33: #{roberta_forward.1} parent=1 // pred_fallthru
      _
    // Predicated region
    $region34: #{roberta_forward.1} parent=1 // pred_check
      _
    $region35: #{roberta_forward.1} parent=1 // pred_check_branch
      %1845 = sbr.rel (0) target = $region37
    $region36: #{roberta_forward.1} parent=1 // pred_region
      %1847 = dma.done [#allocation4], 32
    $region37: #{roberta_forward.1} parent=1 // pred_fallthru
      _
    %1848 = vsyncpa [#allocation3], 1
    %1849 = vsyncpa [#allocation6], 1
    %1850 = vsyncpa [#allocation4], 1

</llo_original>
